<compile_context>
chip_gen: v5e
topology: v5e:2x2
jax: 0.10.0
libtpu: 0.0.40
codegen_flags: <defaults>
</compile_context>

<pallas_src>
import functools

import jax
import jax.numpy as jnp
from jax.experimental import pallas as pl
from jax.experimental.pallas import tpu as pltpu


def _softplus(x):
    # Numerically-stable softplus matching F.softplus (beta=1): max(x,0) + log1p(exp(-|x|)).
    return jnp.maximum(x, 0.0) + jnp.log1p(jnp.exp(-jnp.abs(x)))


def _round_up(n, m):
    return ((n + m - 1) // m) * m


def _supports_bf16_elementwise():
    """bf16 VPU/EUP exists on v6e/v7x; v5e and older are f32-only for elementwise/softplus."""
    try:
        kind = jax.devices()[0].device_kind.lower()
    except Exception:
        return False
    if "tpu" not in kind:
        return False
    for old in ("v2", "v3", "v4", "v5"):
        if old in kind:
            return False
    return True


def _toy_score_kernel(x_ref, w1_ref, b1_ref, w2_ref, b2_ref, w3_ref, b3_ref, o_ref,
                      *, act_dtype):
    x = x_ref[...].astype(act_dtype)                       # (2, TB), batch on lanes

    # --- Layer 1 (in=2): VPU broadcast FMAs, no MXU. act_dtype = bf16 on v6e/v7x, f32 on v5e.
    h = (w1_ref[:, 0:1] * x[0:1, :]
         + w1_ref[:, 1:2] * x[1:2, :]
         + b1_ref[...])                                    # (H, TB)
    h = _softplus(h)

    # --- Layer 2 (H x H): bf16 MXU matmul (weight as LHS), f32 accumulate; bias/softplus f32.
    h = jnp.dot(w2_ref[...], h.astype(jnp.bfloat16),
                preferred_element_type=jnp.float32) + b2_ref[...]
    h = _softplus(h)                                       # (H, TB) f32

    # --- Layer 3 (out=2): VPU mul + cross-sublane reductions; two lane-dense row stores.
    o0 = jnp.sum(h * w3_ref[:, 0:1], axis=0, keepdims=True) + b3_ref[0:1, :]   # (1, TB)
    o1 = jnp.sum(h * w3_ref[:, 1:2], axis=0, keepdims=True) + b3_ref[1:2, :]   # (1, TB)
    o_ref[0:1, :] = o0.astype(o_ref.dtype)
    o_ref[1:2, :] = o1.astype(o_ref.dtype)


def toy_score_network(x, kparams, *, block_rows=1024):
    """x: (B, 2) float32. kparams: output of prepare_kernel_params. Returns (B, 2) float32."""
    B = x.shape[0]
    H = kparams["w1"].shape[0]
    act_dtype = kparams["w1"].dtype

    # Batch is the lane axis -> tile must be a multiple of 128 (hardened regardless of user input).
    tb_cap = max(128, _round_up(block_rows, 128))
    b_pad0 = _round_up(B, 128)
    if b_pad0 >= 2 * 128:
        # Keep >= 2 grid steps so v7x's two TensorCores both get work.
        tb_cap = min(tb_cap, _round_up(pl.cdiv(b_pad0, 2), 128))
    TB = min(tb_cap, b_pad0)
    B_pad = _round_up(B, TB)

    # Feature-major, lane-dense presentation of x: (2, B_pad). Pad columns with zeros
    # (padded columns produce finite garbage that is sliced off; no NaNs).
    xt = x.T
    if B_pad != B:
        xt = jnp.pad(xt, ((0, 0), (0, B_pad - B)))

    w1, b1 = kparams["w1"], kparams["b1"]
    w2, b2 = kparams["w2"], kparams["b2"]
    w3, b3 = kparams["w3"], kparams["b3"]

    const = lambda a: pl.BlockSpec(a.shape, lambda i: (0,) * a.ndim)   # VMEM-resident
    io_spec = pl.BlockSpec((2, TB), lambda i: (0, i))                  # batch on lanes

    flops = 2 * B_pad * (2 * H + H * H + H * 2)
    transcendentals = 4 * B_pad * H                                    # exp + log1p, 2 layers
    bytes_accessed = int(
        2 * B_pad * 4 * 2
        + sum(int(v.size) * v.dtype.itemsize for v in kparams.values())
    )

    out_t = pl.pallas_call(
        functools.partial(_toy_score_kernel, act_dtype=act_dtype),
        out_shape=jax.ShapeDtypeStruct((2, B_pad), jnp.float32),
        grid=(B_pad // TB,),
        in_specs=[io_spec, const(w1), const(b1), const(w2), const(b2), const(w3), const(b3)],
        out_specs=io_spec,
        compiler_params=pltpu.CompilerParams(dimension_semantics=("parallel",)),
        cost_estimate=pl.CostEstimate(flops=flops, transcendentals=transcendentals,
                                      bytes_accessed=bytes_accessed),
    )(xt, w1, b1, w2, b2, w3, b3)

    out = out_t.T
    return out[:B] if B_pad != B else out


def init_params(key, hidden_size=128):
    """f32 params in PyTorch nn.Linear layout: weight (out_features, in_features), bias (out,)."""
    k1, k2, k3, k4, k5, k6 = jax.random.split(key, 6)

    def linear(kw, kb, fan_in, fan_out):
        bound = 1.0 / jnp.sqrt(fan_in)   # PyTorch default uniform(-1/sqrt(fan_in), ...)
        w = jax.random.uniform(kw, (fan_out, fan_in), jnp.float32, -bound, bound)
        b = jax.random.uniform(kb, (fan_out,), jnp.float32, -bound, bound)
        return w, b

    w1, b1 = linear(k1, k2, 2, hidden_size)
    w2, b2 = linear(k3, k4, hidden_size, hidden_size)
    w3, b3 = linear(k5, k6, hidden_size, 2)
    return {"w1": w1, "b1": b1, "w2": w2, "b2": b2, "w3": w3, "b3": b3}


def prepare_kernel_params(p, *, bf16_elementwise=None):
    """One-time repack into kernel (feature-major) layout. w2 always bf16 for the MXU;
    w1/b1 bf16 only when the chip has bf16 VPU/EUP (v6e/v7x)."""
    if bf16_elementwise is None:
        bf16_elementwise = _supports_bf16_elementwise()
    act = jnp.bfloat16 if bf16_elementwise else jnp.float32
    H = p["w1"].shape[0]
    return {
        "w1": p["w1"].astype(act),                          # (H, 2)
        "b1": p["b1"].reshape(H, 1).astype(act),            # (H, 1)
        "w2": p["w2"].astype(jnp.bfloat16),                 # (H, H) bf16 MXU operand (LHS)
        "b2": p["b2"].reshape(H, 1).astype(jnp.float32),    # (H, 1)
        "w3": jnp.asarray(p["w3"].T, jnp.float32),          # (H, 2)
        "b3": p["b3"].reshape(2, 1).astype(jnp.float32),    # (2, 1)
    }


def _reference_matched(x, kp):
    """Pure-JAX reference mirroring the kernel's numerics (same dtypes / layout)."""
    act = kp["w1"].dtype
    xt = x.T.astype(act)
    h = kp["w1"][:, 0:1] * xt[0:1, :] + kp["w1"][:, 1:2] * xt[1:2, :] + kp["b1"]
    h = _softplus(h)
    h = jnp.dot(kp["w2"], h.astype(jnp.bfloat16), preferred_element_type=jnp.float32) + kp["b2"]
    h = _softplus(h)
    o0 = jnp.sum(h * kp["w3"][:, 0:1], axis=0, keepdims=True) + kp["b3"][0:1, :]
    o1 = jnp.sum(h * kp["w3"][:, 1:2], axis=0, keepdims=True) + kp["b3"][1:2, :]
    return jnp.concatenate([o0, o1], axis=0).T


def _reference_f32(x, p):
    """Full-precision f32 reference matching the original PyTorch module."""
    hi = jax.lax.Precision.HIGHEST
    h = jax.nn.softplus(jnp.dot(x, p["w1"].T, precision=hi) + p["b1"])
    h = jax.nn.softplus(jnp.dot(h, p["w2"].T, precision=hi) + p["b2"])
    return jnp.dot(h, p["w3"].T, precision=hi) + p["b3"]


if __name__ == "__main__":
    key = jax.random.PRNGKey(0)
    kx, kp = jax.random.split(key)

    hidden_size = 128     # module default
    batch = 300           # not a multiple of the tile: exercises padding + multi-step grid
    x = jax.random.normal(kx, (batch, 2), jnp.float32)

    params = init_params(kp, hidden_size)                 # f32, PyTorch-equivalent
    kparams = prepare_kernel_params(params)               # kernel layout (bf16 where supported)

    out = toy_score_network(x, kparams, block_rows=128)   # small tiles just for the demo grid
    out = jax.block_until_ready(out)
    assert out.shape == (batch, 2)

    # Tight check vs a reference that mirrors the kernel's own numerics.
    ref_matched = _reference_matched(x, kparams)
    assert jnp.allclose(out, ref_matched, atol=1e-3, rtol=1e-3), "mismatch vs dtype-matched reference"

    # Looser check vs the pure-f32 PyTorch-equivalent math (bf16 MXU / softplus error budget).
    ref_f32 = _reference_f32(x, params)
    assert jnp.allclose(out, ref_f32, atol=3e-2, rtol=3e-2), "mismatch vs f32 reference"

    print("KERNEL_OK")
</pallas_src>

<mosaic_0001>
module attributes {stable_mosaic.version = 11 : i64} {
  func.func @_toy_score_kernel(%arg0: i32, %arg1: memref<2x128xf32, #tpu.memory_space<vmem>>, %arg2: memref<128x2xf32, #tpu.memory_space<vmem>>, %arg3: memref<128x1xf32, #tpu.memory_space<vmem>>, %arg4: memref<128x128xbf16, #tpu.memory_space<vmem>>, %arg5: memref<128x1xf32, #tpu.memory_space<vmem>>, %arg6: memref<128x2xf32, #tpu.memory_space<vmem>>, %arg7: memref<2x1xf32, #tpu.memory_space<vmem>>, %arg8: memref<2x128xf32, #tpu.memory_space<vmem>>) attributes {dimension_semantics = [#tpu.dimension_semantics<parallel>], iteration_bounds = array<i64: 3>, scalar_prefetch = 0 : i64, scratch_operands = 0 : i64, tpu.core_type = #tpu.core_type<tc>, window_params = [{transform_indices = @transform_0, window_bounds = array<i64: 2, 128>}, {pipeline_mode = #tpu.pipeline_mode<synchronous>, transform_indices = @transform_1, window_bounds = array<i64: 128, 2>}, {pipeline_mode = #tpu.pipeline_mode<synchronous>, transform_indices = @transform_2, window_bounds = array<i64: 128, 1>}, {pipeline_mode = #tpu.pipeline_mode<synchronous>, transform_indices = @transform_3, window_bounds = array<i64: 128, 128>}, {pipeline_mode = #tpu.pipeline_mode<synchronous>, transform_indices = @transform_4, window_bounds = array<i64: 128, 1>}, {pipeline_mode = #tpu.pipeline_mode<synchronous>, transform_indices = @transform_5, window_bounds = array<i64: 128, 2>}, {pipeline_mode = #tpu.pipeline_mode<synchronous>, transform_indices = @transform_6, window_bounds = array<i64: 2, 1>}, {transform_indices = @transform_7, window_bounds = array<i64: 2, 128>}]} {
    %c0 = arith.constant 0 : index
    %c0_0 = arith.constant 0 : index
    %0 = vector.load %arg1[%c0, %c0_0] : memref<2x128xf32, #tpu.memory_space<vmem>>, vector<2x128xf32>
    %c0_1 = arith.constant 0 : index
    %c0_2 = arith.constant 0 : index
    %1 = vector.load %arg2[%c0_1, %c0_2] : memref<128x2xf32, #tpu.memory_space<vmem>>, vector<128x1xf32>
    %2 = vector.extract_strided_slice %0 {offsets = [0, 0], sizes = [1, 128], strides = [1, 1]} : vector<2x128xf32> to vector<1x128xf32>
    %3 = vector.broadcast %1 : vector<128x1xf32> to vector<128x128xf32>
    %4 = vector.broadcast %2 : vector<1x128xf32> to vector<128x128xf32>
    %5 = arith.mulf %3, %4 : vector<128x128xf32>
    %c0_3 = arith.constant 0 : index
    %c1 = arith.constant 1 : index
    %6 = vector.load %arg2[%c0_3, %c1] : memref<128x2xf32, #tpu.memory_space<vmem>>, vector<128x1xf32>
    %7 = vector.extract_strided_slice %0 {offsets = [1, 0], sizes = [1, 128], strides = [1, 1]} : vector<2x128xf32> to vector<1x128xf32>
    %8 = vector.broadcast %6 : vector<128x1xf32> to vector<128x128xf32>
    %9 = vector.broadcast %7 : vector<1x128xf32> to vector<128x128xf32>
    %10 = arith.mulf %8, %9 : vector<128x128xf32>
    %11 = arith.addf %5, %10 : vector<128x128xf32>
    %c0_4 = arith.constant 0 : index
    %c0_5 = arith.constant 0 : index
    %12 = vector.load %arg3[%c0_4, %c0_5] : memref<128x1xf32, #tpu.memory_space<vmem>>, vector<128x1xf32>
    %13 = vector.broadcast %12 : vector<128x1xf32> to vector<128x128xf32>
    %14 = arith.addf %11, %13 : vector<128x128xf32>
    %cst = arith.constant 0.000000e+00 : f32
    %15 = vector.broadcast %cst : f32 to vector<128x128xf32>
    %16 = arith.maximumf %14, %15 : vector<128x128xf32>
    %17 = math.absf %14 : vector<128x128xf32>
    %cst_6 = arith.constant 0.000000e+00 : f32
    %18 = vector.broadcast %cst_6 : f32 to vector<128x128xf32>
    %19 = arith.subf %18, %17 : vector<128x128xf32>
    %20 = math.exp %19 : vector<128x128xf32>
    %21 = math.log1p %20 : vector<128x128xf32>
    %22 = arith.addf %16, %21 : vector<128x128xf32>
    %c0_7 = arith.constant 0 : index
    %c0_8 = arith.constant 0 : index
    %23 = vector.load %arg4[%c0_7, %c0_8] : memref<128x128xbf16, #tpu.memory_space<vmem>>, vector<128x128xbf16>
    %24 = arith.truncf %22 : vector<128x128xf32> to vector<128x128xbf16>
    %cst_9 = arith.constant dense<0.000000e+00> : vector<128x128xf32>
    %25 = tpu.matmul %23, %24, %cst_9 {dimension_numbers = #tpu.dot_dimension_numbers<[1], [0], [0], [1], [0, 0, 1, 1], [], []>} : vector<128x128xbf16>, vector<128x128xbf16>, vector<128x128xf32> -> vector<128x128xf32>
    %c0_10 = arith.constant 0 : index
    %c0_11 = arith.constant 0 : index
    %26 = vector.load %arg5[%c0_10, %c0_11] : memref<128x1xf32, #tpu.memory_space<vmem>>, vector<128x1xf32>
    %27 = vector.broadcast %26 : vector<128x1xf32> to vector<128x128xf32>
    %28 = arith.addf %25, %27 : vector<128x128xf32>
    %cst_12 = arith.constant 0.000000e+00 : f32
    %29 = vector.broadcast %cst_12 : f32 to vector<128x128xf32>
    %30 = arith.maximumf %28, %29 : vector<128x128xf32>
    %31 = math.absf %28 : vector<128x128xf32>
    %cst_13 = arith.constant 0.000000e+00 : f32
    %32 = vector.broadcast %cst_13 : f32 to vector<128x128xf32>
    %33 = arith.subf %32, %31 : vector<128x128xf32>
    %34 = math.exp %33 : vector<128x128xf32>
    %35 = math.log1p %34 : vector<128x128xf32>
    %36 = arith.addf %30, %35 : vector<128x128xf32>
    %c0_14 = arith.constant 0 : index
    %c0_15 = arith.constant 0 : index
    %37 = vector.load %arg6[%c0_14, %c0_15] : memref<128x2xf32, #tpu.memory_space<vmem>>, vector<128x1xf32>
    %38 = vector.broadcast %37 : vector<128x1xf32> to vector<128x128xf32>
    %39 = arith.mulf %36, %38 : vector<128x128xf32>
    %cst_16 = arith.constant dense<0.000000e+00> : vector<128xf32>
    %40 = vector.multi_reduction <add>, %39, %cst_16 [0] : vector<128x128xf32> to vector<128xf32>
    %41 = vector.shape_cast %40 : vector<128xf32> to vector<1x128xf32>
    %c0_17 = arith.constant 0 : index
    %c0_18 = arith.constant 0 : index
    %42 = vector.load %arg7[%c0_17, %c0_18] : memref<2x1xf32, #tpu.memory_space<vmem>>, vector<1x1xf32>
    %43 = vector.broadcast %42 : vector<1x1xf32> to vector<1x128xf32>
    %44 = arith.addf %41, %43 : vector<1x128xf32>
    %c0_19 = arith.constant 0 : index
    %c1_20 = arith.constant 1 : index
    %45 = vector.load %arg6[%c0_19, %c1_20] : memref<128x2xf32, #tpu.memory_space<vmem>>, vector<128x1xf32>
    %46 = vector.broadcast %45 : vector<128x1xf32> to vector<128x128xf32>
    %47 = arith.mulf %36, %46 : vector<128x128xf32>
    %cst_21 = arith.constant dense<0.000000e+00> : vector<128xf32>
    %48 = vector.multi_reduction <add>, %47, %cst_21 [0] : vector<128x128xf32> to vector<128xf32>
    %49 = vector.shape_cast %48 : vector<128xf32> to vector<1x128xf32>
    %c1_22 = arith.constant 1 : index
    %c0_23 = arith.constant 0 : index
    %50 = vector.load %arg7[%c1_22, %c0_23] : memref<2x1xf32, #tpu.memory_space<vmem>>, vector<1x1xf32>
    %51 = vector.broadcast %50 : vector<1x1xf32> to vector<1x128xf32>
    %52 = arith.addf %49, %51 : vector<1x128xf32>
    %c0_24 = arith.constant 0 : index
    %c0_25 = arith.constant 0 : index
    %53 = vector.load %arg8[%c0_24, %c0_25] : memref<2x128xf32, #tpu.memory_space<vmem>>, vector<1x128xf32>
    tpu.vector_store %arg8[%c0_24, %c0_25], %44 {strides = array<i32>} : memref<2x128xf32, #tpu.memory_space<vmem>>, vector<1x128xf32>,
    %c1_26 = arith.constant 1 : index
    %c0_27 = arith.constant 0 : index
    %54 = vector.load %arg8[%c1_26, %c0_27] : memref<2x128xf32, #tpu.memory_space<vmem>>, vector<1x128xf32>
    tpu.vector_store %arg8[%c1_26, %c0_27], %52 {strides = array<i32>} : memref<2x128xf32, #tpu.memory_space<vmem>>, vector<1x128xf32>,
    return
  }
  func.func @transform_0(%arg0: i32) -> (i32, i32) {
    %c0_i32 = arith.constant 0 : i32
    %c0_i32_0 = arith.constant 0 : i32
    return %c0_i32, %arg0 : i32, i32
  }
  func.func @transform_1(%arg0: i32) -> (i32, i32) {
    %c0_i32 = arith.constant 0 : i32
    %c0_i32_0 = arith.constant 0 : i32
    %c0_i32_1 = arith.constant 0 : i32
    return %c0_i32, %c0_i32_0 : i32, i32
  }
  func.func @transform_2(%arg0: i32) -> (i32, i32) {
    %c0_i32 = arith.constant 0 : i32
    %c0_i32_0 = arith.constant 0 : i32
    %c0_i32_1 = arith.constant 0 : i32
    return %c0_i32, %c0_i32_0 : i32, i32
  }
  func.func @transform_3(%arg0: i32) -> (i32, i32) {
    %c0_i32 = arith.constant 0 : i32
    %c0_i32_0 = arith.constant 0 : i32
    %c0_i32_1 = arith.constant 0 : i32
    return %c0_i32, %c0_i32_0 : i32, i32
  }
  func.func @transform_4(%arg0: i32) -> (i32, i32) {
    %c0_i32 = arith.constant 0 : i32
    %c0_i32_0 = arith.constant 0 : i32
    %c0_i32_1 = arith.constant 0 : i32
    return %c0_i32, %c0_i32_0 : i32, i32
  }
  func.func @transform_5(%arg0: i32) -> (i32, i32) {
    %c0_i32 = arith.constant 0 : i32
    %c0_i32_0 = arith.constant 0 : i32
    %c0_i32_1 = arith.constant 0 : i32
    return %c0_i32, %c0_i32_0 : i32, i32
  }
  func.func @transform_6(%arg0: i32) -> (i32, i32) {
    %c0_i32 = arith.constant 0 : i32
    %c0_i32_0 = arith.constant 0 : i32
    %c0_i32_1 = arith.constant 0 : i32
    return %c0_i32, %c0_i32_0 : i32, i32
  }
  func.func @transform_7(%arg0: i32) -> (i32, i32) {
    %c0_i32 = arith.constant 0 : i32
    %c0_i32_0 = arith.constant 0 : i32
    return %c0_i32, %arg0 : i32, i32
  }
}

</mosaic_0001>

<llo_original>
// kernel: tpu_custom_call.1
$region0: #{tpu_custom_call.1}
  #allocation0 [shape = 'u32[]', space=smem, size = 0x4, offset = 0x4, fixed_abs, tag = 'smem constant byte address 0x4 - core index']
  #allocation1 [shape = 'u32[72,128]{1,0:T(1,128)}', space=vmem, size = 0x9000, scoped, tag = 'internal scratch']
  %s0 = inlined_call_operand.vmem [shape: f32[2,384], index: 0, kind: input, shape index: {}]
  %s1 = inlined_call_operand.vmem [shape: f32[128,2], index: 1, kind: input, shape index: {}]
  %s2 = inlined_call_operand.vmem [shape: f32[128,1], index: 2, kind: input, shape index: {}]
  %s3 = inlined_call_operand.vmem [shape: bf16[128,128], index: 3, kind: input, shape index: {}]
  %s4 = inlined_call_operand.vmem [shape: f32[128,1], index: 4, kind: input, shape index: {}]
  %s5 = inlined_call_operand.vmem [shape: f32[128,2], index: 5, kind: input, shape index: {}]
  %s6 = inlined_call_operand.vmem [shape: f32[2,1], index: 6, kind: input, shape index: {}]
  %s7 = inlined_call_operand.hbm [shape: f32[2,384], index: 7, kind: output, shape index: {}]
  %s8 = sld [smem:[#allocation0]]
  $region61: #{tpu_custom_call.1} parent=0
    _
  %s10 = ssub.s32 1, %s8
  %s11 = scalar_select 0, %s10, %s8
  $region1: #{tpu_custom_call.1} parent=0
    #allocation2 [shape = 'u8[2048]{0}', space=vmem, size = 0x800, scoped, tag = 'output window, operand 0']
    #allocation3 [shape = 's32[2]{0}', space=sflag, size = 0x8, scoped, tag = 'scoped memory for tpu_custom_call.1']
    %12 = vsyncpa [#allocation3], 0
    %s13 = scalar_lea.sflag [#allocation3], 1
    %14 = vsyncpa %s13, 0
    loop: start=0, step=1, limit=5
    $region2: #{tpu_custom_call.1} parent=1 // loop_pre_header
      _
    $region3: #{tpu_custom_call.1} parent=1 // loop_header
      %s16 = sphi 0, %s20
      %p17 = scmp.ge.s32.totalorder %s16, 5
      %s26 = sphi 0, %s28
      %s29 = sphi 0, %s26
      %s30 = sphi 0, %s29
      %s46 = sphi 0, %s30
      %s50 = sphi 0, %s50
      %s52 = sphi 0, %s50
      %s53 = sphi 0, %s52
      %s67 = sphi 0, %s53
      %s71 = sphi 0, %s71
      %s73 = sphi 0, %s71
      %s74 = sphi 0, %s73
      %s88 = sphi 0, %s74
      %s92 = sphi 0, %s92
      %s94 = sphi 0, %s92
      %s95 = sphi 0, %s94
      %s109 = sphi 0, %s95
      %s113 = sphi 0, %s113
      %s115 = sphi 0, %s113
      %s116 = sphi 0, %s115
      %s130 = sphi 0, %s116
      %s134 = sphi 0, %s134
      %s136 = sphi 0, %s134
      %s137 = sphi 0, %s136
      %s151 = sphi 0, %s137
      %s155 = sphi 0, %s155
      %s157 = sphi 0, %s155
      %s158 = sphi 0, %s157
      %s172 = sphi 0, %s158
      %s178 = sphi 0, %s180
      %s181 = sphi 0, %s178
      %s182 = sphi 0, %s181
      %s198 = sphi 0, %s182
    $region4: #{tpu_custom_call.1} parent=1 // loop_header_branch
      %19 = sbr.rel (%p17) target = $region8
    $region5: #{tpu_custom_call.1} parent=1 // loop_body
      %s21 = ssub.s32 %s16, 1
      %s22 = ssub.s32 %s16, 2
      %s23 = sadd.s32 %s16, 1
      %s24 = ssub.s32 %s16, %s23
      %p25 = scmp.eq.s32.totalorder %s24, 0
      %s27 = sadd.s32 %s26, 1
      %s28 = scalar_select %p25, %s26, %s27
      %p31 = pneg %p25
      %p32 = scmp.eq.s32.totalorder %s16, 2
      %p33 = por %p31, %p32
      %p34 = scmp.ne.s32.totalorder %s26, %s29
      %p35 = scmp.eq.s32.totalorder %s16, 0
      %p36 = por %p34, %p35
      %p37 = scmp.ne.s32.totalorder %s26, %s29
      %p38 = scmp.eq.s32.totalorder %s21, 2
      %p39 = por %p37, %p38
      %p40 = scmp.ne.s32.totalorder %s29, %s30
      %p41 = scmp.eq.s32.totalorder %s21, 0
      %p42 = por %p40, %p41
      %p43 = scmp.ne.s32.totalorder %s29, %s30
      %p44 = scmp.eq.s32.totalorder %s22, 2
      %p45 = por %p43, %p44
      %p47 = scmp.ne.s32.totalorder %s30, %s46
      %p48 = scmp.eq.s32.totalorder %s22, 0
      %p49 = por %p47, %p48
      %s51 = sadd.s32 %s50, 1
      %p54 = scmp.eq.s32.totalorder %s16, 2
      %p55 = scmp.ne.s32.totalorder %s50, %s52
      %p56 = scmp.eq.s32.totalorder %s16, 0
      %p57 = por %p55, %p56
      %p58 = scmp.ne.s32.totalorder %s50, %s52
      %p59 = scmp.eq.s32.totalorder %s21, 2
      %p60 = por %p58, %p59
      %p61 = scmp.ne.s32.totalorder %s52, %s53
      %p62 = scmp.eq.s32.totalorder %s21, 0
      %p63 = por %p61, %p62
      %p64 = scmp.ne.s32.totalorder %s52, %s53
      %p65 = scmp.eq.s32.totalorder %s22, 2
      %p66 = por %p64, %p65
      %p68 = scmp.ne.s32.totalorder %s53, %s67
      %p69 = scmp.eq.s32.totalorder %s22, 0
      %p70 = por %p68, %p69
      %s72 = sadd.s32 %s71, 1
      %p75 = scmp.eq.s32.totalorder %s16, 2
      %p76 = scmp.ne.s32.totalorder %s71, %s73
      %p77 = scmp.eq.s32.totalorder %s16, 0
      %p78 = por %p76, %p77
      %p79 = scmp.ne.s32.totalorder %s71, %s73
      %p80 = scmp.eq.s32.totalorder %s21, 2
      %p81 = por %p79, %p80
      %p82 = scmp.ne.s32.totalorder %s73, %s74
      %p83 = scmp.eq.s32.totalorder %s21, 0
      %p84 = por %p82, %p83
      %p85 = scmp.ne.s32.totalorder %s73, %s74
      %p86 = scmp.eq.s32.totalorder %s22, 2
      %p87 = por %p85, %p86
      %p89 = scmp.ne.s32.totalorder %s74, %s88
      %p90 = scmp.eq.s32.totalorder %s22, 0
      %p91 = por %p89, %p90
      %s93 = sadd.s32 %s92, 1
      %p96 = scmp.eq.s32.totalorder %s16, 2
      %p97 = scmp.ne.s32.totalorder %s92, %s94
      %p98 = scmp.eq.s32.totalorder %s16, 0
      %p99 = por %p97, %p98
      %p100 = scmp.ne.s32.totalorder %s92, %s94
      %p101 = scmp.eq.s32.totalorder %s21, 2
      %p102 = por %p100, %p101
      %p103 = scmp.ne.s32.totalorder %s94, %s95
      %p104 = scmp.eq.s32.totalorder %s21, 0
      %p105 = por %p103, %p104
      %p106 = scmp.ne.s32.totalorder %s94, %s95
      %p107 = scmp.eq.s32.totalorder %s22, 2
      %p108 = por %p106, %p107
      %p110 = scmp.ne.s32.totalorder %s95, %s109
      %p111 = scmp.eq.s32.totalorder %s22, 0
      %p112 = por %p110, %p111
      %s114 = sadd.s32 %s113, 1
      %p117 = scmp.eq.s32.totalorder %s16, 2
      %p118 = scmp.ne.s32.totalorder %s113, %s115
      %p119 = scmp.eq.s32.totalorder %s16, 0
      %p120 = por %p118, %p119
      %p121 = scmp.ne.s32.totalorder %s113, %s115
      %p122 = scmp.eq.s32.totalorder %s21, 2
      %p123 = por %p121, %p122
      %p124 = scmp.ne.s32.totalorder %s115, %s116
      %p125 = scmp.eq.s32.totalorder %s21, 0
      %p126 = por %p124, %p125
      %p127 = scmp.ne.s32.totalorder %s115, %s116
      %p128 = scmp.eq.s32.totalorder %s22, 2
      %p129 = por %p127, %p128
      %p131 = scmp.ne.s32.totalorder %s116, %s130
      %p132 = scmp.eq.s32.totalorder %s22, 0
      %p133 = por %p131, %p132
      %s135 = sadd.s32 %s134, 1
      %p138 = scmp.eq.s32.totalorder %s16, 2
      %p139 = scmp.ne.s32.totalorder %s134, %s136
      %p140 = scmp.eq.s32.totalorder %s16, 0
      %p141 = por %p139, %p140
      %p142 = scmp.ne.s32.totalorder %s134, %s136
      %p143 = scmp.eq.s32.totalorder %s21, 2
      %p144 = por %p142, %p143
      %p145 = scmp.ne.s32.totalorder %s136, %s137
      %p146 = scmp.eq.s32.totalorder %s21, 0
      %p147 = por %p145, %p146
      %p148 = scmp.ne.s32.totalorder %s136, %s137
      %p149 = scmp.eq.s32.totalorder %s22, 2
      %p150 = por %p148, %p149
      %p152 = scmp.ne.s32.totalorder %s137, %s151
      %p153 = scmp.eq.s32.totalorder %s22, 0
      %p154 = por %p152, %p153
      %s156 = sadd.s32 %s155, 1
      %p159 = scmp.eq.s32.totalorder %s16, 2
      %p160 = scmp.ne.s32.totalorder %s155, %s157
      %p161 = scmp.eq.s32.totalorder %s16, 0
      %p162 = por %p160, %p161
      %p163 = scmp.ne.s32.totalorder %s155, %s157
      %p164 = scmp.eq.s32.totalorder %s21, 2
      %p165 = por %p163, %p164
      %p166 = scmp.ne.s32.totalorder %s157, %s158
      %p167 = scmp.eq.s32.totalorder %s21, 0
      %p168 = por %p166, %p167
      %p169 = scmp.ne.s32.totalorder %s157, %s158
      %p170 = scmp.eq.s32.totalorder %s22, 2
      %p171 = por %p169, %p170
      %p173 = scmp.ne.s32.totalorder %s158, %s172
      %p174 = scmp.eq.s32.totalorder %s22, 0
      %p175 = por %p173, %p174
      %s176 = ssub.s32 %s16, %s23
      %p177 = scmp.eq.s32.totalorder %s176, 0
      %s179 = sadd.s32 %s178, 1
      %s180 = scalar_select %p177, %s178, %s179
      %p183 = pneg %p177
      %p184 = scmp.eq.s32.totalorder %s16, 2
      %p185 = por %p183, %p184
      %p186 = scmp.ne.s32.totalorder %s178, %s181
      %p187 = scmp.eq.s32.totalorder %s16, 0
      %p188 = por %p186, %p187
      %p189 = scmp.ne.s32.totalorder %s178, %s181
      %p190 = scmp.eq.s32.totalorder %s21, 2
      %p191 = por %p189, %p190
      %p192 = scmp.ne.s32.totalorder %s181, %s182
      %p193 = scmp.eq.s32.totalorder %s21, 0
      %p194 = por %p192, %p193
      %p195 = scmp.ne.s32.totalorder %s181, %s182
      %p196 = scmp.eq.s32.totalorder %s22, 2
      %p197 = por %p195, %p196
      %p199 = scmp.ne.s32.totalorder %s182, %s198
      %p200 = scmp.eq.s32.totalorder %s22, 0
      %p201 = por %p199, %p200
      %p202 = scmp.le.s32.totalorder 1, %s16
      %p203 = scmp.lt.s32.totalorder %s16, 4
      %p204 = pnand %p202, %p203
      %p205 = pneg %p204
      // Predicated region
      $region9: #{tpu_custom_call.1} parent=5 // pred_check
        _
      $region10: #{tpu_custom_call.1} parent=5 // pred_check_branch
        %207 = sbr.rel (%p204) target = $region12
      $region11: #{tpu_custom_call.1} parent=5 // pred_region
        %s208 = ssub.s32 %s16, 1
        // Predicated region
        $region13: #{tpu_custom_call.1} parent=11 // pred_check
          %p209 = pneg %p63
        $region14: #{tpu_custom_call.1} parent=11 // pred_check_branch
          %211 = sbr.rel (%p209) target = $region16
        $region15: #{tpu_custom_call.1} parent=11 // pred_region
          _
        $region16: #{tpu_custom_call.1} parent=11 // pred_fallthru
          _
        // Predicated region
        $region17: #{tpu_custom_call.1} parent=11 // pred_check
          %p212 = pneg %p84
        $region18: #{tpu_custom_call.1} parent=11 // pred_check_branch
          %214 = sbr.rel (%p212) target = $region20
        $region19: #{tpu_custom_call.1} parent=11 // pred_region
          _
        $region20: #{tpu_custom_call.1} parent=11 // pred_fallthru
          _
        // Predicated region
        $region21: #{tpu_custom_call.1} parent=11 // pred_check
          %p215 = pneg %p105
        $region22: #{tpu_custom_call.1} parent=11 // pred_check_branch
          %217 = sbr.rel (%p215) target = $region24
        $region23: #{tpu_custom_call.1} parent=11 // pred_region
          _
        $region24: #{tpu_custom_call.1} parent=11 // pred_fallthru
          _
        // Predicated region
        $region25: #{tpu_custom_call.1} parent=11 // pred_check
          %p218 = pneg %p126
        $region26: #{tpu_custom_call.1} parent=11 // pred_check_branch
          %220 = sbr.rel (%p218) target = $region28
        $region27: #{tpu_custom_call.1} parent=11 // pred_region
          _
        $region28: #{tpu_custom_call.1} parent=11 // pred_fallthru
          _
        // Predicated region
        $region29: #{tpu_custom_call.1} parent=11 // pred_check
          %p221 = pneg %p147
        $region30: #{tpu_custom_call.1} parent=11 // pred_check_branch
          %223 = sbr.rel (%p221) target = $region32
        $region31: #{tpu_custom_call.1} parent=11 // pred_region
          _
        $region32: #{tpu_custom_call.1} parent=11 // pred_fallthru
          _
        // Predicated region
        $region33: #{tpu_custom_call.1} parent=11 // pred_check
          %p224 = pneg %p168
        $region34: #{tpu_custom_call.1} parent=11 // pred_check_branch
          %226 = sbr.rel (%p224) target = $region36
        $region35: #{tpu_custom_call.1} parent=11 // pred_region
          _
        $region36: #{tpu_custom_call.1} parent=11 // pred_fallthru
          _
      $region12: #{tpu_custom_call.1} parent=5 // pred_fallthru
        _
      %p227 = scmp.lt.s32.totalorder %s16, 3
      // Predicated region
      $region37: #{tpu_custom_call.1} parent=5 // pred_check
        %p228 = pneg %p227
      $region38: #{tpu_custom_call.1} parent=5 // pred_check_branch
        %230 = sbr.rel (%p228) target = $region40
      $region39: #{tpu_custom_call.1} parent=5 // pred_region
        // Predicated region
        $region41: #{tpu_custom_call.1} parent=39 // pred_check
          %p231 = pneg %p36
        $region42: #{tpu_custom_call.1} parent=39 // pred_check_branch
          %233 = sbr.rel (%p231) target = $region44
        $region43: #{tpu_custom_call.1} parent=39 // pred_region
          %p234 = scmp.lt.s32.totalorder %s16, 2
          %s235 = scalar_select %p234, %s16, 2
          %s236 = smul.addr %s235, 2
          %s237 = scalar_lea.vmem %s0, %s236
        $region44: #{tpu_custom_call.1} parent=39 // pred_fallthru
          _
      $region40: #{tpu_custom_call.1} parent=5 // pred_fallthru
        _
      %p238 = scmp.le.s32.totalorder 1, %s16
      %p239 = scmp.lt.s32.totalorder %s16, 4
      %p240 = pnand %p238, %p239
      %p241 = pneg %p240
      // Predicated region
      $region45: #{tpu_custom_call.1} parent=5 // pred_check
        _
      $region46: #{tpu_custom_call.1} parent=5 // pred_check_branch
        %243 = sbr.rel (%p240) target = $region48
      $region47: #{tpu_custom_call.1} parent=5 // pred_region
        %s244 = ssub.s32 %s16, 1
        %p245 = scmp.lt.s32.totalorder %s21, 2
        %s246 = scalar_select %p245, %s21, 2
        %s247 = smul.addr %s246, 2
        %s248 = scalar_lea.vmem %s0, %s247
        %p249 = pneg %p42
        %p250 = pneg %p39
        %p251 = pneg %p63
        %p252 = pneg %p60
        %p253 = pneg %p84
        %p254 = pneg %p81
        %p255 = pneg %p105
        %p256 = pneg %p102
        %p257 = pneg %p126
        %p258 = pneg %p123
        %p259 = pneg %p147
        %p260 = pneg %p144
        %p261 = pneg %p168
        %p262 = pneg %p165
        %p263 = pneg %p194
        %p264 = pneg %p191
        %s265 = sand.u32 %s181, 1
        %s266 = scalar_lea.sflag [#allocation3], %s265
        %s267 = sand.u32 %s181, 1
        %s268 = smul.addr %s267, 2
        %s269 = scalar_lea.vmem [#allocation2], %s268
        %p270 = scmp.lt.s32.totalorder %s21, 2
        %s271 = scalar_select %p270, %s21, 2
        %s272 = smul.addr %s271, 2
        %s273 = scalar_lea.vmem %s0, %s272
        %v274 = vld [vmem:[%s273] sm:$0x3]
        %v275 = vld [vmem:[%s1] sm:$0xff]
        %v276 = vld [vmem:[%s1 + $0x8] sm:$0xff]
        %v277 = vld [vmem:[%s1 + $0x10] sm:$0xff]
        %v278 = vld [vmem:[%s1 + $0x18] sm:$0xff]
        %v279 = vld [vmem:[%s1 + $0x20] sm:$0xff]
        %v280 = vld [vmem:[%s1 + $0x28] sm:$0xff]
        %v281 = vld [vmem:[%s1 + $0x30] sm:$0xff]
        %v282 = vld [vmem:[%s1 + $0x38] sm:$0xff]
        %v283 = vld [vmem:[%s1 + $0x40] sm:$0xff]
        %v284 = vld [vmem:[%s1 + $0x48] sm:$0xff]
        %v285 = vld [vmem:[%s1 + $0x50] sm:$0xff]
        %v286 = vld [vmem:[%s1 + $0x58] sm:$0xff]
        %v287 = vld [vmem:[%s1 + $0x60] sm:$0xff]
        %v288 = vld [vmem:[%s1 + $0x68] sm:$0xff]
        %v289 = vld [vmem:[%s1 + $0x70] sm:$0xff]
        %v290 = vld [vmem:[%s1 + $0x78] sm:$0xff]
        %292 = vset.pattern.permute.xlu0 0
        %293 = vperm.xlu0 %292, %v275
        %v294 = vpop.permute.xlu0 %293
        %297 = vset.pattern.permute.xlu0 0
        %298 = vperm.xlu0 %297, %v276
        %v299 = vpop.permute.xlu0 %298
        %302 = vset.pattern.permute.xlu0 0
        %303 = vperm.xlu0 %302, %v277
        %v304 = vpop.permute.xlu0 %303
        %307 = vset.pattern.permute.xlu0 0
        %308 = vperm.xlu0 %307, %v278
        %v309 = vpop.permute.xlu0 %308
        %312 = vset.pattern.permute.xlu0 0
        %313 = vperm.xlu0 %312, %v279
        %v314 = vpop.permute.xlu0 %313
        %317 = vset.pattern.permute.xlu0 0
        %318 = vperm.xlu0 %317, %v280
        %v319 = vpop.permute.xlu0 %318
        %322 = vset.pattern.permute.xlu0 0
        %323 = vperm.xlu0 %322, %v281
        %v324 = vpop.permute.xlu0 %323
        %327 = vset.pattern.permute.xlu0 0
        %328 = vperm.xlu0 %327, %v282
        %v329 = vpop.permute.xlu0 %328
        %332 = vset.pattern.permute.xlu0 0
        %333 = vperm.xlu0 %332, %v283
        %v334 = vpop.permute.xlu0 %333
        %337 = vset.pattern.permute.xlu0 0
        %338 = vperm.xlu0 %337, %v284
        %v339 = vpop.permute.xlu0 %338
        %342 = vset.pattern.permute.xlu0 0
        %343 = vperm.xlu0 %342, %v285
        %v344 = vpop.permute.xlu0 %343
        %347 = vset.pattern.permute.xlu0 0
        %348 = vperm.xlu0 %347, %v286
        %v349 = vpop.permute.xlu0 %348
        %352 = vset.pattern.permute.xlu0 0
        %353 = vperm.xlu0 %352, %v287
        %v354 = vpop.permute.xlu0 %353
        %357 = vset.pattern.permute.xlu0 0
        %358 = vperm.xlu0 %357, %v288
        %v359 = vpop.permute.xlu0 %358
        %362 = vset.pattern.permute.xlu0 0
        %363 = vperm.xlu0 %362, %v289
        %v364 = vpop.permute.xlu0 %363
        %367 = vset.pattern.permute.xlu0 0
        %368 = vperm.xlu0 %367, %v290
        %v369 = vpop.permute.xlu0 %368
        %v371 = vperm.slane %v274, 0
        %v372 = vmul.f32 %v294, %v371
        %v373 = vmul.f32 %v299, %v371
        %v374 = vmul.f32 %v304, %v371
        %v375 = vmul.f32 %v309, %v371
        %v376 = vmul.f32 %v314, %v371
        %v377 = vmul.f32 %v319, %v371
        %v378 = vmul.f32 %v324, %v371
        %v379 = vmul.f32 %v329, %v371
        %v380 = vmul.f32 %v334, %v371
        %v381 = vmul.f32 %v339, %v371
        %v382 = vmul.f32 %v344, %v371
        %v383 = vmul.f32 %v349, %v371
        %v384 = vmul.f32 %v354, %v371
        %v385 = vmul.f32 %v359, %v371
        %v386 = vmul.f32 %v364, %v371
        %v387 = vmul.f32 %v369, %v371
        %388 = vset.pattern.permute.xlu0 1
        %389 = vperm.xlu0 %388, %v275
        %v390 = vpop.permute.xlu0 %389
        %392 = vset.pattern.permute.xlu0 1
        %393 = vperm.xlu0 %392, %v276
        %v394 = vpop.permute.xlu0 %393
        %396 = vset.pattern.permute.xlu0 1
        %397 = vperm.xlu0 %396, %v277
        %v398 = vpop.permute.xlu0 %397
        %400 = vset.pattern.permute.xlu0 1
        %401 = vperm.xlu0 %400, %v278
        %v402 = vpop.permute.xlu0 %401
        %404 = vset.pattern.permute.xlu0 1
        %405 = vperm.xlu0 %404, %v279
        %v406 = vpop.permute.xlu0 %405
        %408 = vset.pattern.permute.xlu0 1
        %409 = vperm.xlu0 %408, %v280
        %v410 = vpop.permute.xlu0 %409
        %412 = vset.pattern.permute.xlu0 1
        %413 = vperm.xlu0 %412, %v281
        %v414 = vpop.permute.xlu0 %413
        %416 = vset.pattern.permute.xlu0 1
        %417 = vperm.xlu0 %416, %v282
        %v418 = vpop.permute.xlu0 %417
        %420 = vset.pattern.permute.xlu0 1
        %421 = vperm.xlu0 %420, %v283
        %v422 = vpop.permute.xlu0 %421
        %424 = vset.pattern.permute.xlu0 1
        %425 = vperm.xlu0 %424, %v284
        %v426 = vpop.permute.xlu0 %425
        %428 = vset.pattern.permute.xlu0 1
        %429 = vperm.xlu0 %428, %v285
        %v430 = vpop.permute.xlu0 %429
        %432 = vset.pattern.permute.xlu0 1
        %433 = vperm.xlu0 %432, %v286
        %v434 = vpop.permute.xlu0 %433
        %436 = vset.pattern.permute.xlu0 1
        %437 = vperm.xlu0 %436, %v287
        %v438 = vpop.permute.xlu0 %437
        %440 = vset.pattern.permute.xlu0 1
        %441 = vperm.xlu0 %440, %v288
        %v442 = vpop.permute.xlu0 %441
        %444 = vset.pattern.permute.xlu0 1
        %445 = vperm.xlu0 %444, %v289
        %v446 = vpop.permute.xlu0 %445
        %448 = vset.pattern.permute.xlu0 1
        %449 = vperm.xlu0 %448, %v290
        %v450 = vpop.permute.xlu0 %449
        %v452 = vperm.slane %v274, 1
        %v453 = vmul.f32 %v390, %v452
        %v454 = vmul.f32 %v394, %v452
        %v455 = vmul.f32 %v398, %v452
        %v456 = vmul.f32 %v402, %v452
        %v457 = vmul.f32 %v406, %v452
        %v458 = vmul.f32 %v410, %v452
        %v459 = vmul.f32 %v414, %v452
        %v460 = vmul.f32 %v418, %v452
        %v461 = vmul.f32 %v422, %v452
        %v462 = vmul.f32 %v426, %v452
        %v463 = vmul.f32 %v430, %v452
        %v464 = vmul.f32 %v434, %v452
        %v465 = vmul.f32 %v438, %v452
        %v466 = vmul.f32 %v442, %v452
        %v467 = vmul.f32 %v446, %v452
        %v468 = vmul.f32 %v450, %v452
        %v469 = vadd.f32 %v372, %v453
        %v470 = vadd.f32 %v373, %v454
        %v471 = vadd.f32 %v374, %v455
        %v472 = vadd.f32 %v375, %v456
        %v473 = vadd.f32 %v376, %v457
        %v474 = vadd.f32 %v377, %v458
        %v475 = vadd.f32 %v378, %v459
        %v476 = vadd.f32 %v379, %v460
        %v477 = vadd.f32 %v380, %v461
        %v478 = vadd.f32 %v381, %v462
        %v479 = vadd.f32 %v382, %v463
        %v480 = vadd.f32 %v383, %v464
        %v481 = vadd.f32 %v384, %v465
        %v482 = vadd.f32 %v385, %v466
        %v483 = vadd.f32 %v386, %v467
        %v484 = vadd.f32 %v387, %v468
        %v485 = vld [vmem:[%s2] sm:$0xff]
        %v486 = vld [vmem:[%s2 + $0x8] sm:$0xff]
        %v487 = vld [vmem:[%s2 + $0x10] sm:$0xff]
        %v488 = vld [vmem:[%s2 + $0x18] sm:$0xff]
        %v489 = vld [vmem:[%s2 + $0x20] sm:$0xff]
        %v490 = vld [vmem:[%s2 + $0x28] sm:$0xff]
        %v491 = vld [vmem:[%s2 + $0x30] sm:$0xff]
        %v492 = vld [vmem:[%s2 + $0x38] sm:$0xff]
        %v493 = vld [vmem:[%s2 + $0x40] sm:$0xff]
        %v494 = vld [vmem:[%s2 + $0x48] sm:$0xff]
        %v495 = vld [vmem:[%s2 + $0x50] sm:$0xff]
        %v496 = vld [vmem:[%s2 + $0x58] sm:$0xff]
        %v497 = vld [vmem:[%s2 + $0x60] sm:$0xff]
        %v498 = vld [vmem:[%s2 + $0x68] sm:$0xff]
        %v499 = vld [vmem:[%s2 + $0x70] sm:$0xff]
        %v500 = vld [vmem:[%s2 + $0x78] sm:$0xff]
        %502 = vset.pattern.permute.xlu0 0
        %503 = vperm.xlu0 %502, %v485
        %v504 = vpop.permute.xlu0 %503
        %507 = vset.pattern.permute.xlu0 0
        %508 = vperm.xlu0 %507, %v486
        %v509 = vpop.permute.xlu0 %508
        %512 = vset.pattern.permute.xlu0 0
        %513 = vperm.xlu0 %512, %v487
        %v514 = vpop.permute.xlu0 %513
        %517 = vset.pattern.permute.xlu0 0
        %518 = vperm.xlu0 %517, %v488
        %v519 = vpop.permute.xlu0 %518
        %522 = vset.pattern.permute.xlu0 0
        %523 = vperm.xlu0 %522, %v489
        %v524 = vpop.permute.xlu0 %523
        %527 = vset.pattern.permute.xlu0 0
        %528 = vperm.xlu0 %527, %v490
        %v529 = vpop.permute.xlu0 %528
        %532 = vset.pattern.permute.xlu0 0
        %533 = vperm.xlu0 %532, %v491
        %v534 = vpop.permute.xlu0 %533
        %537 = vset.pattern.permute.xlu0 0
        %538 = vperm.xlu0 %537, %v492
        %v539 = vpop.permute.xlu0 %538
        %542 = vset.pattern.permute.xlu0 0
        %543 = vperm.xlu0 %542, %v493
        %v544 = vpop.permute.xlu0 %543
        %547 = vset.pattern.permute.xlu0 0
        %548 = vperm.xlu0 %547, %v494
        %v549 = vpop.permute.xlu0 %548
        %552 = vset.pattern.permute.xlu0 0
        %553 = vperm.xlu0 %552, %v495
        %v554 = vpop.permute.xlu0 %553
        %557 = vset.pattern.permute.xlu0 0
        %558 = vperm.xlu0 %557, %v496
        %v559 = vpop.permute.xlu0 %558
        %562 = vset.pattern.permute.xlu0 0
        %563 = vperm.xlu0 %562, %v497
        %v564 = vpop.permute.xlu0 %563
        %567 = vset.pattern.permute.xlu0 0
        %568 = vperm.xlu0 %567, %v498
        %v569 = vpop.permute.xlu0 %568
        %572 = vset.pattern.permute.xlu0 0
        %573 = vperm.xlu0 %572, %v499
        %v574 = vpop.permute.xlu0 %573
        %577 = vset.pattern.permute.xlu0 0
        %578 = vperm.xlu0 %577, %v500
        %v579 = vpop.permute.xlu0 %578
        %v581 = vadd.f32 %v469, %v504
        %v582 = vadd.f32 %v470, %v509
        %v583 = vadd.f32 %v471, %v514
        %v584 = vadd.f32 %v472, %v519
        %v585 = vadd.f32 %v473, %v524
        %v586 = vadd.f32 %v474, %v529
        %v587 = vadd.f32 %v475, %v534
        %v588 = vadd.f32 %v476, %v539
        %v589 = vadd.f32 %v477, %v544
        %v590 = vadd.f32 %v478, %v549
        %v591 = vadd.f32 %v479, %v554
        %v592 = vadd.f32 %v480, %v559
        %v593 = vadd.f32 %v481, %v564
        %v594 = vadd.f32 %v482, %v569
        %v595 = vadd.f32 %v483, %v574
        %v596 = vadd.f32 %v484, %v579
        %v597 = vmax.f32 %v581, 0.0
        %v598 = vmax.f32 %v582, 0.0
        %v599 = vmax.f32 %v583, 0.0
        %v600 = vmax.f32 %v584, 0.0
        %v601 = vmax.f32 %v585, 0.0
        %v602 = vmax.f32 %v586, 0.0
        %v603 = vmax.f32 %v587, 0.0
        %v604 = vmax.f32 %v588, 0.0
        %v605 = vmax.f32 %v589, 0.0
        %v606 = vmax.f32 %v590, 0.0
        %v607 = vmax.f32 %v591, 0.0
        %v608 = vmax.f32 %v592, 0.0
        %v609 = vmax.f32 %v593, 0.0
        %v610 = vmax.f32 %v594, 0.0
        %v611 = vmax.f32 %v595, 0.0
        %v612 = vmax.f32 %v596, 0.0
        %v613 = vand.u32 2147483647, %v581
        %v614 = vand.u32 2147483647, %v582
        %v615 = vand.u32 2147483647, %v583
        %v616 = vand.u32 2147483647, %v584
        %v617 = vand.u32 2147483647, %v585
        %v618 = vand.u32 2147483647, %v586
        %v619 = vand.u32 2147483647, %v587
        %v620 = vand.u32 2147483647, %v588
        %v621 = vand.u32 2147483647, %v589
        %v622 = vand.u32 2147483647, %v590
        %v623 = vand.u32 2147483647, %v591
        %v624 = vand.u32 2147483647, %v592
        %v625 = vand.u32 2147483647, %v593
        %v626 = vand.u32 2147483647, %v594
        %v627 = vand.u32 2147483647, %v595
        %v628 = vand.u32 2147483647, %v596
        %v629 = vsub.f32 0.0, %v613
        %v630 = vsub.f32 0.0, %v614
        %v631 = vsub.f32 0.0, %v615
        %v632 = vsub.f32 0.0, %v616
        %v633 = vsub.f32 0.0, %v617
        %v634 = vsub.f32 0.0, %v618
        %v635 = vsub.f32 0.0, %v619
        %v636 = vsub.f32 0.0, %v620
        %v637 = vsub.f32 0.0, %v621
        %v638 = vsub.f32 0.0, %v622
        %v639 = vsub.f32 0.0, %v623
        %v640 = vsub.f32 0.0, %v624
        %v641 = vsub.f32 0.0, %v625
        %v642 = vsub.f32 0.0, %v626
        %v643 = vsub.f32 0.0, %v627
        %v644 = vsub.f32 0.0, %v628
        %v645 = vmul.f32 %v629, 1.442695
        %v646 = vpow.pop %v645
        %v647 = vmul.f32 %v630, 1.442695
        %v648 = vpow.pop %v647
        %v649 = vmul.f32 %v631, 1.442695
        %v650 = vpow.pop %v649
        %v651 = vmul.f32 %v632, 1.442695
        %v652 = vpow.pop %v651
        %v653 = vmul.f32 %v633, 1.442695
        %v654 = vpow.pop %v653
        %v655 = vmul.f32 %v634, 1.442695
        %v656 = vpow.pop %v655
        %v657 = vmul.f32 %v635, 1.442695
        %v658 = vpow.pop %v657
        %v659 = vmul.f32 %v636, 1.442695
        %v660 = vpow.pop %v659
        %v661 = vmul.f32 %v637, 1.442695
        %v662 = vpow.pop %v661
        %v663 = vmul.f32 %v638, 1.442695
        %v664 = vpow.pop %v663
        %v665 = vmul.f32 %v639, 1.442695
        %v666 = vpow.pop %v665
        %v667 = vmul.f32 %v640, 1.442695
        %v668 = vpow.pop %v667
        %v669 = vmul.f32 %v641, 1.442695
        %v670 = vpow.pop %v669
        %v671 = vmul.f32 %v642, 1.442695
        %v672 = vpow.pop %v671
        %v673 = vmul.f32 %v643, 1.442695
        %v674 = vpow.pop %v673
        %v675 = vmul.f32 %v644, 1.442695
        %v676 = vpow.pop %v675
        %v677 = vadd.f32 %v646, 1.0
        %v678 = vlog2.pop %v677
        %v679 = vmul.f32 %v678, 0.6931472
        %v680 = vmul.f32 -0.5, %v646
        %v681 = vadd.f32 %v680, 1.0
        %v682 = vmul.f32 %v681, %v646
        %v683 = vand.u32 2147483647, %v646
        %vm684 = vcmp.lt.f32.partialorder %v683, 0.0004427343
        %v685 = vsel %vm684, %v682, %v679
        %v686 = vadd.f32 %v648, 1.0
        %v687 = vlog2.pop %v686
        %v688 = vmul.f32 %v687, 0.6931472
        %v689 = vmul.f32 -0.5, %v648
        %v690 = vadd.f32 %v689, 1.0
        %v691 = vmul.f32 %v690, %v648
        %v692 = vand.u32 2147483647, %v648
        %vm693 = vcmp.lt.f32.partialorder %v692, 0.0004427343
        %v694 = vsel %vm693, %v691, %v688
        %v695 = vadd.f32 %v650, 1.0
        %v696 = vlog2.pop %v695
        %v697 = vmul.f32 %v696, 0.6931472
        %v698 = vmul.f32 -0.5, %v650
        %v699 = vadd.f32 %v698, 1.0
        %v700 = vmul.f32 %v699, %v650
        %v701 = vand.u32 2147483647, %v650
        %vm702 = vcmp.lt.f32.partialorder %v701, 0.0004427343
        %v703 = vsel %vm702, %v700, %v697
        %v704 = vadd.f32 %v652, 1.0
        %v705 = vlog2.pop %v704
        %v706 = vmul.f32 %v705, 0.6931472
        %v707 = vmul.f32 -0.5, %v652
        %v708 = vadd.f32 %v707, 1.0
        %v709 = vmul.f32 %v708, %v652
        %v710 = vand.u32 2147483647, %v652
        %vm711 = vcmp.lt.f32.partialorder %v710, 0.0004427343
        %v712 = vsel %vm711, %v709, %v706
        %v713 = vadd.f32 %v654, 1.0
        %v714 = vlog2.pop %v713
        %v715 = vmul.f32 %v714, 0.6931472
        %v716 = vmul.f32 -0.5, %v654
        %v717 = vadd.f32 %v716, 1.0
        %v718 = vmul.f32 %v717, %v654
        %v719 = vand.u32 2147483647, %v654
        %vm720 = vcmp.lt.f32.partialorder %v719, 0.0004427343
        %v721 = vsel %vm720, %v718, %v715
        %v722 = vadd.f32 %v656, 1.0
        %v723 = vlog2.pop %v722
        %v724 = vmul.f32 %v723, 0.6931472
        %v725 = vmul.f32 -0.5, %v656
        %v726 = vadd.f32 %v725, 1.0
        %v727 = vmul.f32 %v726, %v656
        %v728 = vand.u32 2147483647, %v656
        %vm729 = vcmp.lt.f32.partialorder %v728, 0.0004427343
        %v730 = vsel %vm729, %v727, %v724
        %v731 = vadd.f32 %v658, 1.0
        %v732 = vlog2.pop %v731
        %v733 = vmul.f32 %v732, 0.6931472
        %v734 = vmul.f32 -0.5, %v658
        %v735 = vadd.f32 %v734, 1.0
        %v736 = vmul.f32 %v735, %v658
        %v737 = vand.u32 2147483647, %v658
        %vm738 = vcmp.lt.f32.partialorder %v737, 0.0004427343
        %v739 = vsel %vm738, %v736, %v733
        %v740 = vadd.f32 %v660, 1.0
        %v741 = vlog2.pop %v740
        %v742 = vmul.f32 %v741, 0.6931472
        %v743 = vmul.f32 -0.5, %v660
        %v744 = vadd.f32 %v743, 1.0
        %v745 = vmul.f32 %v744, %v660
        %v746 = vand.u32 2147483647, %v660
        %vm747 = vcmp.lt.f32.partialorder %v746, 0.0004427343
        %v748 = vsel %vm747, %v745, %v742
        %v749 = vadd.f32 %v662, 1.0
        %v750 = vlog2.pop %v749
        %v751 = vmul.f32 %v750, 0.6931472
        %v752 = vmul.f32 -0.5, %v662
        %v753 = vadd.f32 %v752, 1.0
        %v754 = vmul.f32 %v753, %v662
        %v755 = vand.u32 2147483647, %v662
        %vm756 = vcmp.lt.f32.partialorder %v755, 0.0004427343
        %v757 = vsel %vm756, %v754, %v751
        %v758 = vadd.f32 %v664, 1.0
        %v759 = vlog2.pop %v758
        %v760 = vmul.f32 %v759, 0.6931472
        %v761 = vmul.f32 -0.5, %v664
        %v762 = vadd.f32 %v761, 1.0
        %v763 = vmul.f32 %v762, %v664
        %v764 = vand.u32 2147483647, %v664
        %vm765 = vcmp.lt.f32.partialorder %v764, 0.0004427343
        %v766 = vsel %vm765, %v763, %v760
        %v767 = vadd.f32 %v666, 1.0
        %v768 = vlog2.pop %v767
        %v769 = vmul.f32 %v768, 0.6931472
        %v770 = vmul.f32 -0.5, %v666
        %v771 = vadd.f32 %v770, 1.0
        %v772 = vmul.f32 %v771, %v666
        %v773 = vand.u32 2147483647, %v666
        %vm774 = vcmp.lt.f32.partialorder %v773, 0.0004427343
        %v775 = vsel %vm774, %v772, %v769
        %v776 = vadd.f32 %v668, 1.0
        %v777 = vlog2.pop %v776
        %v778 = vmul.f32 %v777, 0.6931472
        %v779 = vmul.f32 -0.5, %v668
        %v780 = vadd.f32 %v779, 1.0
        %v781 = vmul.f32 %v780, %v668
        %v782 = vand.u32 2147483647, %v668
        %vm783 = vcmp.lt.f32.partialorder %v782, 0.0004427343
        %v784 = vsel %vm783, %v781, %v778
        %v785 = vadd.f32 %v670, 1.0
        %v786 = vlog2.pop %v785
        %v787 = vmul.f32 %v786, 0.6931472
        %v788 = vmul.f32 -0.5, %v670
        %v789 = vadd.f32 %v788, 1.0
        %v790 = vmul.f32 %v789, %v670
        %v791 = vand.u32 2147483647, %v670
        %vm792 = vcmp.lt.f32.partialorder %v791, 0.0004427343
        %v793 = vsel %vm792, %v790, %v787
        %v794 = vadd.f32 %v672, 1.0
        %v795 = vlog2.pop %v794
        %v796 = vmul.f32 %v795, 0.6931472
        %v797 = vmul.f32 -0.5, %v672
        %v798 = vadd.f32 %v797, 1.0
        %v799 = vmul.f32 %v798, %v672
        %v800 = vand.u32 2147483647, %v672
        %vm801 = vcmp.lt.f32.partialorder %v800, 0.0004427343
        %v802 = vsel %vm801, %v799, %v796
        %v803 = vadd.f32 %v674, 1.0
        %v804 = vlog2.pop %v803
        %v805 = vmul.f32 %v804, 0.6931472
        %v806 = vmul.f32 -0.5, %v674
        %v807 = vadd.f32 %v806, 1.0
        %v808 = vmul.f32 %v807, %v674
        %v809 = vand.u32 2147483647, %v674
        %vm810 = vcmp.lt.f32.partialorder %v809, 0.0004427343
        %v811 = vsel %vm810, %v808, %v805
        %v812 = vadd.f32 %v676, 1.0
        %v813 = vlog2.pop %v812
        %v814 = vmul.f32 %v813, 0.6931472
        %v815 = vmul.f32 -0.5, %v676
        %v816 = vadd.f32 %v815, 1.0
        %v817 = vmul.f32 %v816, %v676
        %v818 = vand.u32 2147483647, %v676
        %vm819 = vcmp.lt.f32.partialorder %v818, 0.0004427343
        %v820 = vsel %vm819, %v817, %v814
        %v821 = vadd.f32 %v597, %v685
        %v822 = vadd.f32 %v598, %v694
        %v823 = vadd.f32 %v599, %v703
        %v824 = vadd.f32 %v600, %v712
        %v825 = vadd.f32 %v601, %v721
        %v826 = vadd.f32 %v602, %v730
        %v827 = vadd.f32 %v603, %v739
        %v828 = vadd.f32 %v604, %v748
        %v829 = vadd.f32 %v605, %v757
        %v830 = vadd.f32 %v606, %v766
        %v831 = vadd.f32 %v607, %v775
        %v832 = vadd.f32 %v608, %v784
        %v833 = vadd.f32 %v609, %v793
        %v834 = vadd.f32 %v610, %v802
        %v835 = vadd.f32 %v611, %v811
        %v836 = vadd.f32 %v612, %v820
        %v837 = vld [vmem:[%s3] sm:$0xf]
        %v838 = vld [vmem:[%s3 + $0x4] sm:$0xf]
        %v839 = vld [vmem:[%s3 + $0x8] sm:$0xf]
        %v840 = vld [vmem:[%s3 + $0xc] sm:$0xf]
        %v841 = vld [vmem:[%s3 + $0x10] sm:$0xf]
        %v842 = vld [vmem:[%s3 + $0x14] sm:$0xf]
        %v843 = vld [vmem:[%s3 + $0x18] sm:$0xf]
        %v844 = vld [vmem:[%s3 + $0x1c] sm:$0xf]
        %v845 = vld [vmem:[%s3 + $0x20] sm:$0xf]
        %v846 = vld [vmem:[%s3 + $0x24] sm:$0xf]
        %v847 = vld [vmem:[%s3 + $0x28] sm:$0xf]
        %v848 = vld [vmem:[%s3 + $0x2c] sm:$0xf]
        %v849 = vld [vmem:[%s3 + $0x30] sm:$0xf]
        %v850 = vld [vmem:[%s3 + $0x34] sm:$0xf]
        %v851 = vld [vmem:[%s3 + $0x38] sm:$0xf]
        %v852 = vld [vmem:[%s3 + $0x3c] sm:$0xf]
        %v853 = vpack.c.bf16 %v822, %v821
        %v854 = vpack.c.bf16 %v824, %v823
        %v855 = vpack.c.bf16 %v826, %v825
        %v856 = vpack.c.bf16 %v828, %v827
        %v857 = vpack.c.bf16 %v830, %v829
        %v858 = vpack.c.bf16 %v832, %v831
        %v859 = vpack.c.bf16 %v834, %v833
        %v860 = vpack.c.bf16 %v836, %v835
        %v861 = vld [vmem:[%s4] sm:$0xff]
        %v862 = vld [vmem:[%s4 + $0x8] sm:$0xff]
        %v863 = vld [vmem:[%s4 + $0x10] sm:$0xff]
        %v864 = vld [vmem:[%s4 + $0x18] sm:$0xff]
        %v865 = vld [vmem:[%s4 + $0x20] sm:$0xff]
        %v866 = vld [vmem:[%s4 + $0x28] sm:$0xff]
        %v867 = vld [vmem:[%s4 + $0x30] sm:$0xff]
        %v868 = vld [vmem:[%s4 + $0x38] sm:$0xff]
        %v869 = vld [vmem:[%s4 + $0x40] sm:$0xff]
        %v870 = vld [vmem:[%s4 + $0x48] sm:$0xff]
        %v871 = vld [vmem:[%s4 + $0x50] sm:$0xff]
        %v872 = vld [vmem:[%s4 + $0x58] sm:$0xff]
        %v873 = vld [vmem:[%s4 + $0x60] sm:$0xff]
        %v874 = vld [vmem:[%s4 + $0x68] sm:$0xff]
        %v875 = vld [vmem:[%s4 + $0x70] sm:$0xff]
        %v876 = vld [vmem:[%s4 + $0x78] sm:$0xff]
        %878 = vset.pattern.permute.xlu0 0
        %879 = vperm.xlu0 %878, %v861
        %v880 = vpop.permute.xlu0 %879
        %883 = vset.pattern.permute.xlu0 0
        %884 = vperm.xlu0 %883, %v862
        %v885 = vpop.permute.xlu0 %884
        %888 = vset.pattern.permute.xlu0 0
        %889 = vperm.xlu0 %888, %v863
        %v890 = vpop.permute.xlu0 %889
        %893 = vset.pattern.permute.xlu0 0
        %894 = vperm.xlu0 %893, %v864
        %v895 = vpop.permute.xlu0 %894
        %898 = vset.pattern.permute.xlu0 0
        %899 = vperm.xlu0 %898, %v865
        %v900 = vpop.permute.xlu0 %899
        %903 = vset.pattern.permute.xlu0 0
        %904 = vperm.xlu0 %903, %v866
        %v905 = vpop.permute.xlu0 %904
        %908 = vset.pattern.permute.xlu0 0
        %909 = vperm.xlu0 %908, %v867
        %v910 = vpop.permute.xlu0 %909
        %913 = vset.pattern.permute.xlu0 0
        %914 = vperm.xlu0 %913, %v868
        %v915 = vpop.permute.xlu0 %914
        %918 = vset.pattern.permute.xlu0 0
        %919 = vperm.xlu0 %918, %v869
        %v920 = vpop.permute.xlu0 %919
        %923 = vset.pattern.permute.xlu0 0
        %924 = vperm.xlu0 %923, %v870
        %v925 = vpop.permute.xlu0 %924
        %928 = vset.pattern.permute.xlu0 0
        %929 = vperm.xlu0 %928, %v871
        %v930 = vpop.permute.xlu0 %929
        %933 = vset.pattern.permute.xlu0 0
        %934 = vperm.xlu0 %933, %v872
        %v935 = vpop.permute.xlu0 %934
        %938 = vset.pattern.permute.xlu0 0
        %939 = vperm.xlu0 %938, %v873
        %v940 = vpop.permute.xlu0 %939
        %943 = vset.pattern.permute.xlu0 0
        %944 = vperm.xlu0 %943, %v874
        %v945 = vpop.permute.xlu0 %944
        %948 = vset.pattern.permute.xlu0 0
        %949 = vperm.xlu0 %948, %v875
        %v950 = vpop.permute.xlu0 %949
        %953 = vset.pattern.permute.xlu0 0
        %954 = vperm.xlu0 %953, %v876
        %v955 = vpop.permute.xlu0 %954
        %v973 = vunpack.c.l.b16 %v837
        %v974 = vunpack.c.l.b16 %v838
        %v975 = vunpack.c.l.b16 %v839
        %v976 = vunpack.c.l.b16 %v840
        %v977 = vunpack.c.l.b16 %v841
        %v978 = vunpack.c.l.b16 %v842
        %v979 = vunpack.c.l.b16 %v843
        %v980 = vunpack.c.l.b16 %v844
        %v981 = vunpack.c.l.b16 %v845
        %v982 = vunpack.c.l.b16 %v846
        %v983 = vunpack.c.l.b16 %v847
        %v984 = vunpack.c.l.b16 %v848
        %v985 = vunpack.c.l.b16 %v849
        %v986 = vunpack.c.l.b16 %v850
        %v987 = vunpack.c.l.b16 %v851
        %v988 = vunpack.c.l.b16 %v852
        %v989 = vpack.c.b16 %v974, %v973
        %v990 = vpack.c.b16 %v976, %v975
        %v991 = vpack.c.b16 %v978, %v977
        %v992 = vpack.c.b16 %v980, %v979
        %v993 = vpack.c.b16 %v982, %v981
        %v994 = vpack.c.b16 %v984, %v983
        %v995 = vpack.c.b16 %v986, %v985
        %v996 = vpack.c.b16 %v988, %v987
        %1005 = vmatpush.bf16.msra.mxu0 %v860
        %1006 = vmatpush.bf16.msra.mxu0 %v859
        %1007 = vmatpush.bf16.msra.mxu0 %v858
        %1008 = vmatpush.bf16.msra.mxu0 %v857
        %1009 = vmatpush.bf16.msra.mxu0 %v856
        %1010 = vmatpush.bf16.msra.mxu0 %v855
        %1011 = vmatpush.bf16.msra.mxu0 %v854
        %1012 = vmatpush.bf16.msra.mxu0 %v853
        %1013 = vmatmul.bf16.gmra.mxu0 %v989
        %v1014 = vpop.f32.mrf.mxu0
        %v1015 = vadd.f32 %v880, %v1014
        %v1016 = vpop.f32.mrf.mxu0
        %v1017 = vadd.f32 %v885, %v1016
        %1018 = vmatmul.bf16.gmra.mxu0 %v990
        %v1019 = vpop.f32.mrf.mxu0
        %v1020 = vadd.f32 %v890, %v1019
        %v1021 = vpop.f32.mrf.mxu0
        %v1022 = vadd.f32 %v895, %v1021
        %1023 = vmatmul.bf16.gmra.mxu0 %v991
        %v1024 = vpop.f32.mrf.mxu0
        %v1025 = vadd.f32 %v900, %v1024
        %v1026 = vpop.f32.mrf.mxu0
        %v1027 = vadd.f32 %v905, %v1026
        %1028 = vmatmul.bf16.gmra.mxu0 %v992
        %v1029 = vpop.f32.mrf.mxu0
        %v1030 = vadd.f32 %v910, %v1029
        %v1031 = vpop.f32.mrf.mxu0
        %v1032 = vadd.f32 %v915, %v1031
        %1033 = vmatmul.bf16.gmra.mxu0 %v993
        %v1034 = vpop.f32.mrf.mxu0
        %v1035 = vadd.f32 %v920, %v1034
        %v1036 = vpop.f32.mrf.mxu0
        %v1037 = vadd.f32 %v925, %v1036
        %1038 = vmatmul.bf16.gmra.mxu0 %v994
        %v1039 = vpop.f32.mrf.mxu0
        %v1040 = vadd.f32 %v930, %v1039
        %v1041 = vpop.f32.mrf.mxu0
        %v1042 = vadd.f32 %v935, %v1041
        %1043 = vmatmul.bf16.gmra.mxu0 %v995
        %v1044 = vpop.f32.mrf.mxu0
        %v1045 = vadd.f32 %v940, %v1044
        %v1046 = vpop.f32.mrf.mxu0
        %v1047 = vadd.f32 %v945, %v1046
        %1048 = vmatmul.bf16.gmra.mxu0 %v996
        %v1049 = vpop.f32.mrf.mxu0
        %v1050 = vadd.f32 %v950, %v1049
        %v1051 = vpop.f32.mrf.mxu0
        %v1052 = vadd.f32 %v955, %v1051
        %1053 = vdwg.mxu0
        %v1054 = vmax.f32 %v1015, 0.0
        %v1055 = vmax.f32 %v1017, 0.0
        %v1056 = vmax.f32 %v1020, 0.0
        %v1057 = vmax.f32 %v1022, 0.0
        %v1058 = vmax.f32 %v1025, 0.0
        %v1059 = vmax.f32 %v1027, 0.0
        %v1060 = vmax.f32 %v1030, 0.0
        %v1061 = vmax.f32 %v1032, 0.0
        %v1062 = vmax.f32 %v1035, 0.0
        %v1063 = vmax.f32 %v1037, 0.0
        %v1064 = vmax.f32 %v1040, 0.0
        %v1065 = vmax.f32 %v1042, 0.0
        %v1066 = vmax.f32 %v1045, 0.0
        %v1067 = vmax.f32 %v1047, 0.0
        %v1068 = vmax.f32 %v1050, 0.0
        %v1069 = vmax.f32 %v1052, 0.0
        %v1070 = vand.u32 2147483647, %v1015
        %v1071 = vand.u32 2147483647, %v1017
        %v1072 = vand.u32 2147483647, %v1020
        %v1073 = vand.u32 2147483647, %v1022
        %v1074 = vand.u32 2147483647, %v1025
        %v1075 = vand.u32 2147483647, %v1027
        %v1076 = vand.u32 2147483647, %v1030
        %v1077 = vand.u32 2147483647, %v1032
        %v1078 = vand.u32 2147483647, %v1035
        %v1079 = vand.u32 2147483647, %v1037
        %v1080 = vand.u32 2147483647, %v1040
        %v1081 = vand.u32 2147483647, %v1042
        %v1082 = vand.u32 2147483647, %v1045
        %v1083 = vand.u32 2147483647, %v1047
        %v1084 = vand.u32 2147483647, %v1050
        %v1085 = vand.u32 2147483647, %v1052
        %v1086 = vsub.f32 0.0, %v1070
        %v1087 = vsub.f32 0.0, %v1071
        %v1088 = vsub.f32 0.0, %v1072
        %v1089 = vsub.f32 0.0, %v1073
        %v1090 = vsub.f32 0.0, %v1074
        %v1091 = vsub.f32 0.0, %v1075
        %v1092 = vsub.f32 0.0, %v1076
        %v1093 = vsub.f32 0.0, %v1077
        %v1094 = vsub.f32 0.0, %v1078
        %v1095 = vsub.f32 0.0, %v1079
        %v1096 = vsub.f32 0.0, %v1080
        %v1097 = vsub.f32 0.0, %v1081
        %v1098 = vsub.f32 0.0, %v1082
        %v1099 = vsub.f32 0.0, %v1083
        %v1100 = vsub.f32 0.0, %v1084
        %v1101 = vsub.f32 0.0, %v1085
        %v1102 = vmul.f32 %v1086, 1.442695
        %v1103 = vpow.pop %v1102
        %v1104 = vmul.f32 %v1087, 1.442695
        %v1105 = vpow.pop %v1104
        %v1106 = vmul.f32 %v1088, 1.442695
        %v1107 = vpow.pop %v1106
        %v1108 = vmul.f32 %v1089, 1.442695
        %v1109 = vpow.pop %v1108
        %v1110 = vmul.f32 %v1090, 1.442695
        %v1111 = vpow.pop %v1110
        %v1112 = vmul.f32 %v1091, 1.442695
        %v1113 = vpow.pop %v1112
        %v1114 = vmul.f32 %v1092, 1.442695
        %v1115 = vpow.pop %v1114
        %v1116 = vmul.f32 %v1093, 1.442695
        %v1117 = vpow.pop %v1116
        %v1118 = vmul.f32 %v1094, 1.442695
        %v1119 = vpow.pop %v1118
        %v1120 = vmul.f32 %v1095, 1.442695
        %v1121 = vpow.pop %v1120
        %v1122 = vmul.f32 %v1096, 1.442695
        %v1123 = vpow.pop %v1122
        %v1124 = vmul.f32 %v1097, 1.442695
        %v1125 = vpow.pop %v1124
        %v1126 = vmul.f32 %v1098, 1.442695
        %v1127 = vpow.pop %v1126
        %v1128 = vmul.f32 %v1099, 1.442695
        %v1129 = vpow.pop %v1128
        %v1130 = vmul.f32 %v1100, 1.442695
        %v1131 = vpow.pop %v1130
        %v1132 = vmul.f32 %v1101, 1.442695
        %v1133 = vpow.pop %v1132
        %v1134 = vadd.f32 %v1103, 1.0
        %v1135 = vlog2.pop %v1134
        %v1136 = vmul.f32 %v1135, 0.6931472
        %v1137 = vmul.f32 -0.5, %v1103
        %v1138 = vadd.f32 %v1137, 1.0
        %v1139 = vmul.f32 %v1138, %v1103
        %v1140 = vand.u32 2147483647, %v1103
        %vm1141 = vcmp.lt.f32.partialorder %v1140, 0.0004427343
        %v1142 = vsel %vm1141, %v1139, %v1136
        %v1143 = vadd.f32 %v1105, 1.0
        %v1144 = vlog2.pop %v1143
        %v1145 = vmul.f32 %v1144, 0.6931472
        %v1146 = vmul.f32 -0.5, %v1105
        %v1147 = vadd.f32 %v1146, 1.0
        %v1148 = vmul.f32 %v1147, %v1105
        %v1149 = vand.u32 2147483647, %v1105
        %vm1150 = vcmp.lt.f32.partialorder %v1149, 0.0004427343
        %v1151 = vsel %vm1150, %v1148, %v1145
        %v1152 = vadd.f32 %v1107, 1.0
        %v1153 = vlog2.pop %v1152
        %v1154 = vmul.f32 %v1153, 0.6931472
        %v1155 = vmul.f32 -0.5, %v1107
        %v1156 = vadd.f32 %v1155, 1.0
        %v1157 = vmul.f32 %v1156, %v1107
        %v1158 = vand.u32 2147483647, %v1107
        %vm1159 = vcmp.lt.f32.partialorder %v1158, 0.0004427343
        %v1160 = vsel %vm1159, %v1157, %v1154
        %v1161 = vadd.f32 %v1109, 1.0
        %v1162 = vlog2.pop %v1161
        %v1163 = vmul.f32 %v1162, 0.6931472
        %v1164 = vmul.f32 -0.5, %v1109
        %v1165 = vadd.f32 %v1164, 1.0
        %v1166 = vmul.f32 %v1165, %v1109
        %v1167 = vand.u32 2147483647, %v1109
        %vm1168 = vcmp.lt.f32.partialorder %v1167, 0.0004427343
        %v1169 = vsel %vm1168, %v1166, %v1163
        %v1170 = vadd.f32 %v1111, 1.0
        %v1171 = vlog2.pop %v1170
        %v1172 = vmul.f32 %v1171, 0.6931472
        %v1173 = vmul.f32 -0.5, %v1111
        %v1174 = vadd.f32 %v1173, 1.0
        %v1175 = vmul.f32 %v1174, %v1111
        %v1176 = vand.u32 2147483647, %v1111
        %vm1177 = vcmp.lt.f32.partialorder %v1176, 0.0004427343
        %v1178 = vsel %vm1177, %v1175, %v1172
        %v1179 = vadd.f32 %v1113, 1.0
        %v1180 = vlog2.pop %v1179
        %v1181 = vmul.f32 %v1180, 0.6931472
        %v1182 = vmul.f32 -0.5, %v1113
        %v1183 = vadd.f32 %v1182, 1.0
        %v1184 = vmul.f32 %v1183, %v1113
        %v1185 = vand.u32 2147483647, %v1113
        %vm1186 = vcmp.lt.f32.partialorder %v1185, 0.0004427343
        %v1187 = vsel %vm1186, %v1184, %v1181
        %v1188 = vadd.f32 %v1115, 1.0
        %v1189 = vlog2.pop %v1188
        %v1190 = vmul.f32 %v1189, 0.6931472
        %v1191 = vmul.f32 -0.5, %v1115
        %v1192 = vadd.f32 %v1191, 1.0
        %v1193 = vmul.f32 %v1192, %v1115
        %v1194 = vand.u32 2147483647, %v1115
        %vm1195 = vcmp.lt.f32.partialorder %v1194, 0.0004427343
        %v1196 = vsel %vm1195, %v1193, %v1190
        %v1197 = vadd.f32 %v1117, 1.0
        %v1198 = vlog2.pop %v1197
        %v1199 = vmul.f32 %v1198, 0.6931472
        %v1200 = vmul.f32 -0.5, %v1117
        %v1201 = vadd.f32 %v1200, 1.0
        %v1202 = vmul.f32 %v1201, %v1117
        %v1203 = vand.u32 2147483647, %v1117
        %vm1204 = vcmp.lt.f32.partialorder %v1203, 0.0004427343
        %v1205 = vsel %vm1204, %v1202, %v1199
        %v1206 = vadd.f32 %v1119, 1.0
        %v1207 = vlog2.pop %v1206
        %v1208 = vmul.f32 %v1207, 0.6931472
        %v1209 = vmul.f32 -0.5, %v1119
        %v1210 = vadd.f32 %v1209, 1.0
        %v1211 = vmul.f32 %v1210, %v1119
        %v1212 = vand.u32 2147483647, %v1119
        %vm1213 = vcmp.lt.f32.partialorder %v1212, 0.0004427343
        %v1214 = vsel %vm1213, %v1211, %v1208
        %v1215 = vadd.f32 %v1121, 1.0
        %v1216 = vlog2.pop %v1215
        %v1217 = vmul.f32 %v1216, 0.6931472
        %v1218 = vmul.f32 -0.5, %v1121
        %v1219 = vadd.f32 %v1218, 1.0
        %v1220 = vmul.f32 %v1219, %v1121
        %v1221 = vand.u32 2147483647, %v1121
        %vm1222 = vcmp.lt.f32.partialorder %v1221, 0.0004427343
        %v1223 = vsel %vm1222, %v1220, %v1217
        %v1224 = vadd.f32 %v1123, 1.0
        %v1225 = vlog2.pop %v1224
        %v1226 = vmul.f32 %v1225, 0.6931472
        %v1227 = vmul.f32 -0.5, %v1123
        %v1228 = vadd.f32 %v1227, 1.0
        %v1229 = vmul.f32 %v1228, %v1123
        %v1230 = vand.u32 2147483647, %v1123
        %vm1231 = vcmp.lt.f32.partialorder %v1230, 0.0004427343
        %v1232 = vsel %vm1231, %v1229, %v1226
        %v1233 = vadd.f32 %v1125, 1.0
        %v1234 = vlog2.pop %v1233
        %v1235 = vmul.f32 %v1234, 0.6931472
        %v1236 = vmul.f32 -0.5, %v1125
        %v1237 = vadd.f32 %v1236, 1.0
        %v1238 = vmul.f32 %v1237, %v1125
        %v1239 = vand.u32 2147483647, %v1125
        %vm1240 = vcmp.lt.f32.partialorder %v1239, 0.0004427343
        %v1241 = vsel %vm1240, %v1238, %v1235
        %v1242 = vadd.f32 %v1127, 1.0
        %v1243 = vlog2.pop %v1242
        %v1244 = vmul.f32 %v1243, 0.6931472
        %v1245 = vmul.f32 -0.5, %v1127
        %v1246 = vadd.f32 %v1245, 1.0
        %v1247 = vmul.f32 %v1246, %v1127
        %v1248 = vand.u32 2147483647, %v1127
        %vm1249 = vcmp.lt.f32.partialorder %v1248, 0.0004427343
        %v1250 = vsel %vm1249, %v1247, %v1244
        %v1251 = vadd.f32 %v1129, 1.0
        %v1252 = vlog2.pop %v1251
        %v1253 = vmul.f32 %v1252, 0.6931472
        %v1254 = vmul.f32 -0.5, %v1129
        %v1255 = vadd.f32 %v1254, 1.0
        %v1256 = vmul.f32 %v1255, %v1129
        %v1257 = vand.u32 2147483647, %v1129
        %vm1258 = vcmp.lt.f32.partialorder %v1257, 0.0004427343
        %v1259 = vsel %vm1258, %v1256, %v1253
        %v1260 = vadd.f32 %v1131, 1.0
        %v1261 = vlog2.pop %v1260
        %v1262 = vmul.f32 %v1261, 0.6931472
        %v1263 = vmul.f32 -0.5, %v1131
        %v1264 = vadd.f32 %v1263, 1.0
        %v1265 = vmul.f32 %v1264, %v1131
        %v1266 = vand.u32 2147483647, %v1131
        %vm1267 = vcmp.lt.f32.partialorder %v1266, 0.0004427343
        %v1268 = vsel %vm1267, %v1265, %v1262
        %v1269 = vadd.f32 %v1133, 1.0
        %v1270 = vlog2.pop %v1269
        %v1271 = vmul.f32 %v1270, 0.6931472
        %v1272 = vmul.f32 -0.5, %v1133
        %v1273 = vadd.f32 %v1272, 1.0
        %v1274 = vmul.f32 %v1273, %v1133
        %v1275 = vand.u32 2147483647, %v1133
        %vm1276 = vcmp.lt.f32.partialorder %v1275, 0.0004427343
        %v1277 = vsel %vm1276, %v1274, %v1271
        %v1278 = vadd.f32 %v1054, %v1142
        %v1279 = vadd.f32 %v1055, %v1151
        %v1280 = vadd.f32 %v1056, %v1160
        %v1281 = vadd.f32 %v1057, %v1169
        %v1282 = vadd.f32 %v1058, %v1178
        %v1283 = vadd.f32 %v1059, %v1187
        %v1284 = vadd.f32 %v1060, %v1196
        %v1285 = vadd.f32 %v1061, %v1205
        %v1286 = vadd.f32 %v1062, %v1214
        %v1287 = vadd.f32 %v1063, %v1223
        %v1288 = vadd.f32 %v1064, %v1232
        %v1289 = vadd.f32 %v1065, %v1241
        %v1290 = vadd.f32 %v1066, %v1250
        %v1291 = vadd.f32 %v1067, %v1259
        %v1292 = vadd.f32 %v1068, %v1268
        %v1293 = vadd.f32 %v1069, %v1277
        %v1294 = vld [vmem:[%s5] sm:$0xff]
        %v1295 = vld [vmem:[%s5 + $0x8] sm:$0xff]
        %v1296 = vld [vmem:[%s5 + $0x10] sm:$0xff]
        %v1297 = vld [vmem:[%s5 + $0x18] sm:$0xff]
        %v1298 = vld [vmem:[%s5 + $0x20] sm:$0xff]
        %v1299 = vld [vmem:[%s5 + $0x28] sm:$0xff]
        %v1300 = vld [vmem:[%s5 + $0x30] sm:$0xff]
        %v1301 = vld [vmem:[%s5 + $0x38] sm:$0xff]
        %v1302 = vld [vmem:[%s5 + $0x40] sm:$0xff]
        %v1303 = vld [vmem:[%s5 + $0x48] sm:$0xff]
        %v1304 = vld [vmem:[%s5 + $0x50] sm:$0xff]
        %v1305 = vld [vmem:[%s5 + $0x58] sm:$0xff]
        %v1306 = vld [vmem:[%s5 + $0x60] sm:$0xff]
        %v1307 = vld [vmem:[%s5 + $0x68] sm:$0xff]
        %v1308 = vld [vmem:[%s5 + $0x70] sm:$0xff]
        %v1309 = vld [vmem:[%s5 + $0x78] sm:$0xff]
        %1311 = vset.pattern.permute.xlu0 0
        %1312 = vperm.xlu0 %1311, %v1294
        %v1313 = vpop.permute.xlu0 %1312
        %1316 = vset.pattern.permute.xlu0 0
        %1317 = vperm.xlu0 %1316, %v1295
        %v1318 = vpop.permute.xlu0 %1317
        %1321 = vset.pattern.permute.xlu0 0
        %1322 = vperm.xlu0 %1321, %v1296
        %v1323 = vpop.permute.xlu0 %1322
        %1326 = vset.pattern.permute.xlu0 0
        %1327 = vperm.xlu0 %1326, %v1297
        %v1328 = vpop.permute.xlu0 %1327
        %1331 = vset.pattern.permute.xlu0 0
        %1332 = vperm.xlu0 %1331, %v1298
        %v1333 = vpop.permute.xlu0 %1332
        %1336 = vset.pattern.permute.xlu0 0
        %1337 = vperm.xlu0 %1336, %v1299
        %v1338 = vpop.permute.xlu0 %1337
        %1341 = vset.pattern.permute.xlu0 0
        %1342 = vperm.xlu0 %1341, %v1300
        %v1343 = vpop.permute.xlu0 %1342
        %1346 = vset.pattern.permute.xlu0 0
        %1347 = vperm.xlu0 %1346, %v1301
        %v1348 = vpop.permute.xlu0 %1347
        %1351 = vset.pattern.permute.xlu0 0
        %1352 = vperm.xlu0 %1351, %v1302
        %v1353 = vpop.permute.xlu0 %1352
        %1356 = vset.pattern.permute.xlu0 0
        %1357 = vperm.xlu0 %1356, %v1303
        %v1358 = vpop.permute.xlu0 %1357
        %1361 = vset.pattern.permute.xlu0 0
        %1362 = vperm.xlu0 %1361, %v1304
        %v1363 = vpop.permute.xlu0 %1362
        %1366 = vset.pattern.permute.xlu0 0
        %1367 = vperm.xlu0 %1366, %v1305
        %v1368 = vpop.permute.xlu0 %1367
        %1371 = vset.pattern.permute.xlu0 0
        %1372 = vperm.xlu0 %1371, %v1306
        %v1373 = vpop.permute.xlu0 %1372
        %1376 = vset.pattern.permute.xlu0 0
        %1377 = vperm.xlu0 %1376, %v1307
        %v1378 = vpop.permute.xlu0 %1377
        %1381 = vset.pattern.permute.xlu0 0
        %1382 = vperm.xlu0 %1381, %v1308
        %v1383 = vpop.permute.xlu0 %1382
        %1386 = vset.pattern.permute.xlu0 0
        %1387 = vperm.xlu0 %1386, %v1309
        %v1388 = vpop.permute.xlu0 %1387
        %v1390 = vmul.f32 %v1278, %v1313
        %v1391 = vmul.f32 %v1279, %v1318
        %v1392 = vmul.f32 %v1280, %v1323
        %v1393 = vmul.f32 %v1281, %v1328
        %v1394 = vmul.f32 %v1282, %v1333
        %v1395 = vmul.f32 %v1283, %v1338
        %v1396 = vmul.f32 %v1284, %v1343
        %v1397 = vmul.f32 %v1285, %v1348
        %v1398 = vmul.f32 %v1286, %v1353
        %v1399 = vmul.f32 %v1287, %v1358
        %v1400 = vmul.f32 %v1288, %v1363
        %v1401 = vmul.f32 %v1289, %v1368
        %v1402 = vmul.f32 %v1290, %v1373
        %v1403 = vmul.f32 %v1291, %v1378
        %v1404 = vmul.f32 %v1292, %v1383
        %v1405 = vmul.f32 %v1293, %v1388
        %v1406 = vadd.f32 %v1390, %v1391
        %v1407 = vadd.f32 %v1406, %v1392
        %v1408 = vadd.f32 %v1407, %v1393
        %v1409 = vadd.f32 %v1408, %v1394
        %v1410 = vadd.f32 %v1409, %v1395
        %v1411 = vadd.f32 %v1410, %v1396
        %v1412 = vadd.f32 %v1411, %v1397
        %v1413 = vadd.f32 %v1412, %v1398
        %v1414 = vadd.f32 %v1413, %v1399
        %v1415 = vadd.f32 %v1414, %v1400
        %v1416 = vadd.f32 %v1415, %v1401
        %v1417 = vadd.f32 %v1416, %v1402
        %v1418 = vadd.f32 %v1417, %v1403
        %v1419 = vadd.f32 %v1418, %v1404
        %v1420 = vadd.f32 %v1419, %v1405
        %v1421 = vrot.slane %v1420, 4
        %v1422 = vadd.f32 %v1420, %v1421
        %v1423 = vrot.slane %v1422, 2
        %v1424 = vadd.f32 %v1422, %v1423
        %v1425 = vrot.slane %v1424, 1
        %v1426 = vadd.f32 %v1424, %v1425
        %v1427 = vld [vmem:[%s6] sm:$0x1]
        %1429 = vset.pattern.permute.xlu0 0
        %1430 = vperm.xlu0 %1429, %v1427
        %v1431 = vpop.permute.xlu0 %1430
        %v1433 = vadd.f32 %v1426, %v1431
        %1434 = vset.pattern.permute.xlu0 1
        %1435 = vperm.xlu0 %1434, %v1294
        %v1436 = vpop.permute.xlu0 %1435
        %1438 = vset.pattern.permute.xlu0 1
        %1439 = vperm.xlu0 %1438, %v1295
        %v1440 = vpop.permute.xlu0 %1439
        %1442 = vset.pattern.permute.xlu0 1
        %1443 = vperm.xlu0 %1442, %v1296
        %v1444 = vpop.permute.xlu0 %1443
        %1446 = vset.pattern.permute.xlu0 1
        %1447 = vperm.xlu0 %1446, %v1297
        %v1448 = vpop.permute.xlu0 %1447
        %1450 = vset.pattern.permute.xlu0 1
        %1451 = vperm.xlu0 %1450, %v1298
        %v1452 = vpop.permute.xlu0 %1451
        %1454 = vset.pattern.permute.xlu0 1
        %1455 = vperm.xlu0 %1454, %v1299
        %v1456 = vpop.permute.xlu0 %1455
        %1458 = vset.pattern.permute.xlu0 1
        %1459 = vperm.xlu0 %1458, %v1300
        %v1460 = vpop.permute.xlu0 %1459
        %1462 = vset.pattern.permute.xlu0 1
        %1463 = vperm.xlu0 %1462, %v1301
        %v1464 = vpop.permute.xlu0 %1463
        %1466 = vset.pattern.permute.xlu0 1
        %1467 = vperm.xlu0 %1466, %v1302
        %v1468 = vpop.permute.xlu0 %1467
        %1470 = vset.pattern.permute.xlu0 1
        %1471 = vperm.xlu0 %1470, %v1303
        %v1472 = vpop.permute.xlu0 %1471
        %1474 = vset.pattern.permute.xlu0 1
        %1475 = vperm.xlu0 %1474, %v1304
        %v1476 = vpop.permute.xlu0 %1475
        %1478 = vset.pattern.permute.xlu0 1
        %1479 = vperm.xlu0 %1478, %v1305
        %v1480 = vpop.permute.xlu0 %1479
        %1482 = vset.pattern.permute.xlu0 1
        %1483 = vperm.xlu0 %1482, %v1306
        %v1484 = vpop.permute.xlu0 %1483
        %1486 = vset.pattern.permute.xlu0 1
        %1487 = vperm.xlu0 %1486, %v1307
        %v1488 = vpop.permute.xlu0 %1487
        %1490 = vset.pattern.permute.xlu0 1
        %1491 = vperm.xlu0 %1490, %v1308
        %v1492 = vpop.permute.xlu0 %1491
        %1494 = vset.pattern.permute.xlu0 1
        %1495 = vperm.xlu0 %1494, %v1309
        %v1496 = vpop.permute.xlu0 %1495
        %v1498 = vmul.f32 %v1278, %v1436
        %v1499 = vmul.f32 %v1279, %v1440
        %v1500 = vmul.f32 %v1280, %v1444
        %v1501 = vmul.f32 %v1281, %v1448
        %v1502 = vmul.f32 %v1282, %v1452
        %v1503 = vmul.f32 %v1283, %v1456
        %v1504 = vmul.f32 %v1284, %v1460
        %v1505 = vmul.f32 %v1285, %v1464
        %v1506 = vmul.f32 %v1286, %v1468
        %v1507 = vmul.f32 %v1287, %v1472
        %v1508 = vmul.f32 %v1288, %v1476
        %v1509 = vmul.f32 %v1289, %v1480
        %v1510 = vmul.f32 %v1290, %v1484
        %v1511 = vmul.f32 %v1291, %v1488
        %v1512 = vmul.f32 %v1292, %v1492
        %v1513 = vmul.f32 %v1293, %v1496
        %v1514 = vadd.f32 %v1498, %v1499
        %v1515 = vadd.f32 %v1514, %v1500
        %v1516 = vadd.f32 %v1515, %v1501
        %v1517 = vadd.f32 %v1516, %v1502
        %v1518 = vadd.f32 %v1517, %v1503
        %v1519 = vadd.f32 %v1518, %v1504
        %v1520 = vadd.f32 %v1519, %v1505
        %v1521 = vadd.f32 %v1520, %v1506
        %v1522 = vadd.f32 %v1521, %v1507
        %v1523 = vadd.f32 %v1522, %v1508
        %v1524 = vadd.f32 %v1523, %v1509
        %v1525 = vadd.f32 %v1524, %v1510
        %v1526 = vadd.f32 %v1525, %v1511
        %v1527 = vadd.f32 %v1526, %v1512
        %v1528 = vadd.f32 %v1527, %v1513
        %v1529 = vrot.slane %v1528, 4
        %v1530 = vadd.f32 %v1528, %v1529
        %v1531 = vrot.slane %v1530, 2
        %v1532 = vadd.f32 %v1530, %v1531
        %v1533 = vrot.slane %v1532, 1
        %v1534 = vadd.f32 %v1532, %v1533
        %v1535 = vld [vmem:[%s6 + $0x1] sm:$0x1]
        %1537 = vset.pattern.permute.xlu0 0
        %1538 = vperm.xlu0 %1537, %v1535
        %v1539 = vpop.permute.xlu0 %1538
        %v1541 = vadd.f32 %v1534, %v1539
        %1542 = vst [vmem:[%s269] sm:$0x1] %v1433
        %1543 = vst [vmem:[%s269 + $0x1] sm:$0x1] %v1541
        %s1544 = sand.u32 %s181, 1
        %s1545 = scalar_lea.sflag [#allocation3], %s1544
        %s1546 = sand.u32 %s181, 1
        %s1547 = smul.addr %s1546, 2
        %s1548 = scalar_lea.vmem [#allocation2], %s1547
        // Predicated region
        $region49: #{tpu_custom_call.1} parent=47 // pred_check
          %p1549 = pneg %p191
        $region50: #{tpu_custom_call.1} parent=47 // pred_check_branch
          %1551 = sbr.rel (%p1549) target = $region52
        $region51: #{tpu_custom_call.1} parent=47 // pred_region
          %1553 = vsyncadd %s1545, 0
          %s1554 = smul.addr %s21, 2
          %s1555 = scalar_lea.hbm %s7, %s1554
          %s1557 = sshll.u32 %s1548, 4
          %s1558 = int_to_ptr.vmem [resolvable:$true] %s1557
          %s1559 = sshll.u32 %s1555, 4
          %s1560 = int_to_ptr.hbm [resolvable:$true] %s1559
          %1562 = dma.vmem_to_hbm [thread:$0]  %s1558, 32, %s1560, %s1545
        $region52: #{tpu_custom_call.1} parent=47 // pred_fallthru
          _
      $region48: #{tpu_custom_call.1} parent=5 // pred_fallthru
        _
      %p1563 = scmp.le.s32.totalorder 2, %s16
      // Predicated region
      $region53: #{tpu_custom_call.1} parent=5 // pred_check
        %p1564 = pneg %p1563
      $region54: #{tpu_custom_call.1} parent=5 // pred_check_branch
        %1566 = sbr.rel (%p1564) target = $region56
      $region55: #{tpu_custom_call.1} parent=5 // pred_region
        %s1567 = ssub.s32 %s16, 2
        // Predicated region
        $region57: #{tpu_custom_call.1} parent=55 // pred_check
          %p1568 = pneg %p197
        $region58: #{tpu_custom_call.1} parent=55 // pred_check_branch
          %1570 = sbr.rel (%p1568) target = $region60
        $region59: #{tpu_custom_call.1} parent=55 // pred_region
          %s1571 = sand.u32 %s182, 1
          %s1572 = scalar_lea.sflag [#allocation3], %s1571
          %s1573 = sand.u32 %s182, 1
          %s1574 = smul.addr %s1573, 2
          %s1575 = scalar_lea.vmem [#allocation2], %s1574
          %1577 = dma.done %s1572, 32
        $region60: #{tpu_custom_call.1} parent=55 // pred_fallthru
          _
      $region56: #{tpu_custom_call.1} parent=5 // pred_fallthru
        _
    $region6: #{tpu_custom_call.1} parent=1 // loop_footer
      %s20 = sadd.s32 1, %s16
    $region7: #{tpu_custom_call.1} parent=1 // loop_footer_branch
      %15 = sbr.rel target = $region3
    $region8: #{tpu_custom_call.1} parent=1 // loop_exit
      _
    %1578 = vsyncpa [#allocation3], 1
    %s1579 = scalar_lea.sflag [#allocation3], 1
    %1580 = vsyncpa %s1579, 1

</llo_original>
